<compile_context>
chip_gen: v6e
topology: v6e:2x2x1
jax: 0.10.0
libtpu: 0.0.40
codegen_flags: <defaults>
</compile_context>

<pallas_src>
import functools

import jax
import jax.numpy as jnp
from jax.experimental import pallas as pl
from jax.experimental.pallas import tpu as pltpu

_LANE = 128
_NEG_INF = -1e30
_RESIDENT_BYTES = 8 << 20      # keep the VMEM-resident activation <= 8 MiB
_VMEM_CAP = 56 << 20           # stay below v7x's 64 MiB physical VMEM / core


def _round_up(v, m):
    return ((v + m - 1) // m) * m


def _choose_geometry(n):
    """Pick (n_pad, tm, tk).

    tk: adjacency contraction (lane) tile, as large as possible (<= 2048)
        while keeping zero-row padding of adj below ~12.5%.
    tm: row tile (<= 512, power of two), shrunk so there are >= 2 row tiles
        whenever possible (v7x megacore sharding of the "parallel" axis).
    """
    n = max(n, 1)
    n_min = _round_up(n, _LANE)
    budget = max(n_min, _round_up(int(n * 1.125) + 1, _LANE))
    tk = _LANE
    for cand in (2048, 1024, 512, 256):
        if cand <= budget and _round_up(n, cand) <= budget:
            tk = cand
            break
    n_pad = _round_up(n, tk)
    tm = min(512, tk)
    while tm > 64 and n_pad // tm < 2:
        tm //= 2
    return n_pad, tm, tk


def _vmem_limit(nbytes):
    return int(min(max(nbytes * 5 // 4 + (4 << 20), 16 << 20), _VMEM_CAP))


# ---------------------------------------------------------------------------
# Pass A: s' = (ReLU(x @ W1a) @ W1b) @ W2   (row tiled, weights VMEM-resident)
# ---------------------------------------------------------------------------
def _feat_kernel(x_ref, w1a_ref, w1b_ref, w2_ref, s_ref):
    s1 = jnp.dot(x_ref[...], w1a_ref[...], preferred_element_type=jnp.float32)
    s1 = jnp.maximum(s1, 0.0).astype(jnp.bfloat16)
    s2 = jnp.dot(s1, w1b_ref[...], preferred_element_type=jnp.float32)
    s3 = jnp.dot(s2.astype(jnp.bfloat16), w2_ref[...],
                 preferred_element_type=jnp.float32)
    s_ref[...] = s3.astype(s_ref.dtype)


# ---------------------------------------------------------------------------
# Passes B/C: out = [log_softmax](adj @ v + bias)
#   (row x adj-K tiled, f32 accumulator; v is either VMEM-resident full matrix
#    or a streamed (tk, c_pad) slab)
# ---------------------------------------------------------------------------
def _hop_kernel(adj_ref, v_ref, b_ref, o_ref, acc_ref, *,
                tk, resident, nclass, apply_log_softmax):
    k = pl.program_id(1)

    @pl.when(k == 0)
    def _():
        acc_ref[...] = jnp.zeros_like(acc_ref)

    if resident:
        off = pl.multiple_of(k * tk, tk)
        v = v_ref[pl.ds(off, tk), :]
    else:
        v = v_ref[...]
    acc_ref[...] += jnp.dot(adj_ref[...], v,
                            preferred_element_type=jnp.float32)

    @pl.when(k == pl.num_programs(1) - 1)
    def _():
        h = acc_ref[...] + b_ref[...]                       # f32 (tm, c_pad)
        # TODO(synk): F.dropout after each layer is identity (inference).
        if apply_log_softmax:
            # Mask padded class columns so they don't affect the log-sum-exp.
            col = jax.lax.broadcasted_iota(jnp.int32, h.shape, 1)
            h = jnp.where(col < nclass, h, _NEG_INF)
            m = jnp.max(h, axis=1, keepdims=True)
            z = h - m
            lse = jnp.log(jnp.sum(jnp.exp(z), axis=1, keepdims=True))
            o_ref[...] = (z - lse).astype(o_ref.dtype)
        else:
            o_ref[...] = h.astype(o_ref.dtype)


@jax.jit
def gcn_fs_forward(x, adj, w1a, w1b, b1, w2, b2):
    n, f_in = x.shape
    hidden = w1a.shape[1]
    mid = w1b.shape[1]
    nclass = w2.shape[1]

    # --- padded / tiled geometry --------------------------------------------
    n_pad, tm, tk = _choose_geometry(n)
    f_pad = _round_up(f_in, _LANE)
    h_pad = _round_up(hidden, _LANE)
    m_pad = _round_up(mid, _LANE)
    c_pad = _round_up(nclass, _LANE)

    n_row_tiles = n_pad // tm
    n_k_tiles = n_pad // tk
    resident = (n_pad * c_pad * 2) <= _RESIDENT_BYTES

    def pad2(a, rows, cols, dtype):
        return jnp.pad(
            a, ((0, rows - a.shape[0]), (0, cols - a.shape[1]))).astype(dtype)

    xp = pad2(x, n_pad, f_pad, jnp.bfloat16)
    adjp = pad2(adj, n_pad, n_pad, jnp.bfloat16)
    w1ap = pad2(w1a, f_pad, h_pad, jnp.bfloat16)
    w1bp = pad2(w1b, h_pad, m_pad, jnp.bfloat16)
    w2p = pad2(w2, m_pad, c_pad, jnp.bfloat16)
    # Fold gc1 bias through W2 (exact: (adj@s + b1)@W2 == adj@(s@W2) + b1@W2).
    b1w2 = pad2(jnp.dot(b1.astype(jnp.float32), w2.astype(jnp.float32)),
                1, c_pad, jnp.float32)
    b2p = pad2(b2, 1, c_pad, jnp.float32)

    # --- Pass A: feature transform with W2 folded in -------------------------
    feat_vmem = (2 * tm * f_pad * 2 + 2 * f_pad * h_pad * 2
                 + 2 * h_pad * m_pad * 2 + 2 * m_pad * c_pad * 2
                 + 2 * tm * c_pad * 2 + (1 << 20))
    s = pl.pallas_call(
        _feat_kernel,
        out_shape=jax.ShapeDtypeStruct((n_pad, c_pad), jnp.bfloat16),
        grid=(n_row_tiles,),
        in_specs=[
            pl.BlockSpec((tm, f_pad), lambda i: (i, 0)),
            pl.BlockSpec((f_pad, h_pad), lambda i: (0, 0)),
            pl.BlockSpec((h_pad, m_pad), lambda i: (0, 0)),
            pl.BlockSpec((m_pad, c_pad), lambda i: (0, 0)),
        ],
        out_specs=pl.BlockSpec((tm, c_pad), lambda i: (i, 0)),
        compiler_params=pltpu.CompilerParams(
            dimension_semantics=("parallel",),
            vmem_limit_bytes=_vmem_limit(feat_vmem)),
        cost_estimate=pl.CostEstimate(
            flops=2 * n_pad * (f_pad * h_pad + h_pad * m_pad + m_pad * c_pad),
            transcendentals=0,
            bytes_accessed=2 * (n_pad * f_pad + f_pad * h_pad + h_pad * m_pad
                                + m_pad * c_pad + n_pad * c_pad)),
    )(xp, w1ap, w1bp, w2p)

    # --- Passes B/C: the two adjacency hops (shared kernel) -------------------
    adj_bufs = 3 if n_k_tiles >= 3 else 2
    if n_k_tiles >= 3:
        adj_spec = pl.BlockSpec((tm, tk), lambda i, k: (i, k),
                                pipeline_mode=pl.Buffered(3))
    else:
        adj_spec = pl.BlockSpec((tm, tk), lambda i, k: (i, k))

    if resident:
        # Constant index map: fetched once, held in VMEM for the whole grid.
        v_spec = pl.BlockSpec((n_pad, c_pad), lambda i, k: (0, 0))
        v_vmem = 2 * n_pad * c_pad * 2
        v_hbm = n_pad * c_pad * 2
    else:
        v_spec = pl.BlockSpec((tk, c_pad), lambda i, k: (k, 0))
        v_vmem = 2 * tk * c_pad * 2
        v_hbm = n_row_tiles * n_pad * c_pad * 2      # re-streamed per row tile

    hop_vmem = (adj_bufs * tm * tk * 2 + v_vmem
                + tm * c_pad * 4 + 2 * tm * c_pad * 4 + (1 << 20))
    hop_params = pltpu.CompilerParams(
        dimension_semantics=("parallel", "arbitrary"),
        vmem_limit_bytes=_vmem_limit(hop_vmem))

    def hop(v, bias, out_dtype, apply_log_softmax):
        out_bytes = n_pad * c_pad * (4 if out_dtype == jnp.float32 else 2)
        return pl.pallas_call(
            functools.partial(_hop_kernel, tk=tk, resident=resident,
                              nclass=nclass,
                              apply_log_softmax=apply_log_softmax),
            out_shape=jax.ShapeDtypeStruct((n_pad, c_pad), out_dtype),
            grid=(n_row_tiles, n_k_tiles),
            in_specs=[adj_spec, v_spec,
                      pl.BlockSpec((1, c_pad), lambda i, k: (0, 0))],
            out_specs=pl.BlockSpec((tm, c_pad), lambda i, k: (i, 0)),
            scratch_shapes=[pltpu.VMEM((tm, c_pad), jnp.float32)],
            compiler_params=hop_params,
            cost_estimate=pl.CostEstimate(
                flops=2 * n_pad * n_pad * c_pad,
                transcendentals=(n_pad * c_pad if apply_log_softmax else 0),
                bytes_accessed=2 * n_pad * n_pad + v_hbm + out_bytes),
        )(adjp, v, bias)

    t = hop(s, b1w2, jnp.bfloat16, apply_log_softmax=False)
    out_pad = hop(t, b2p, jnp.float32, apply_log_softmax=True)

    return out_pad[:n, :nclass]


def _glorot_uniform(key, shape):
    # pygcn-style init: U(-1/sqrt(fan_out), 1/sqrt(fan_out))
    bound = 1.0 / jnp.sqrt(jnp.asarray(shape[-1], jnp.float32))
    return jax.random.uniform(key, shape, jnp.float32, -bound, bound)


def _reference_forward(x, adj, w1a, w1b, b1, w2, b2):
    # Mirrors the kernel's (W2-folded) bf16-operand / f32-accumulate arithmetic.
    bf = lambda a: a.astype(jnp.bfloat16)
    f32 = jnp.float32
    s1 = jnp.maximum(jnp.dot(bf(x), bf(w1a), preferred_element_type=f32), 0.0)
    s2 = jnp.dot(bf(s1), bf(w1b), preferred_element_type=f32)
    sp = jnp.dot(bf(s2), bf(w2), preferred_element_type=f32)
    t = jnp.dot(bf(adj), bf(sp), preferred_element_type=f32) + jnp.dot(b1, w2)
    h2 = jnp.dot(bf(adj), bf(t), preferred_element_type=f32) + b2
    return jax.nn.log_softmax(h2, axis=1)


if __name__ == "__main__":
    # Small shapes: N=16 nodes, inputfeature=8, hidden_units=32,
    # middle_output=16, nclass=8, dropout (inference -> identity).
    N, F_IN, HIDDEN, MID, NCLASS = 16, 8, 32, 16, 8

    key = jax.random.PRNGKey(0)
    k_x, k_adj, k_w1a, k_w1b, k_b1, k_w2, k_b2 = jax.random.split(key, 7)

    x = jax.random.normal(k_x, (N, F_IN), jnp.float32)

    # Deterministic row-normalized adjacency with self-loops.
    a = (jax.random.uniform(k_adj, (N, N)) > 0.7).astype(jnp.float32)
    a = jnp.maximum(a, a.T) + jnp.eye(N, dtype=jnp.float32)
    adj = a / jnp.sum(a, axis=1, keepdims=True)

    w1a = _glorot_uniform(k_w1a, (F_IN, HIDDEN))
    w1b = _glorot_uniform(k_w1b, (HIDDEN, MID))
    b1 = _glorot_uniform(k_b1, (1, MID))
    w2 = _glorot_uniform(k_w2, (MID, NCLASS))
    b2 = _glorot_uniform(k_b2, (1, NCLASS))

    out = gcn_fs_forward(x, adj, w1a, w1b, b1, w2, b2)
    out = jax.block_until_ready(out)

    ref = _reference_forward(x, adj, w1a, w1b, b1, w2, b2)
    assert out.shape == (N, NCLASS)
    assert jnp.allclose(out, ref, atol=2e-2, rtol=2e-2), "mismatch vs JAX reference"

    print("KERNEL_OK")
</pallas_src>

<mosaic_0001>
module attributes {stable_mosaic.version = 11 : i64} {
  func.func @_feat_kernel(%arg0: i32, %arg1: memref<64x128xbf16, #tpu.memory_space<vmem>>, %arg2: memref<128x128xbf16, #tpu.memory_space<vmem>>, %arg3: memref<128x128xbf16, #tpu.memory_space<vmem>>, %arg4: memref<128x128xbf16, #tpu.memory_space<vmem>>, %arg5: memref<64x128xbf16, #tpu.memory_space<vmem>>) attributes {dimension_semantics = [#tpu.dimension_semantics<parallel>], iteration_bounds = array<i64: 2>, scalar_prefetch = 0 : i64, scratch_operands = 0 : i64, tpu.core_type = #tpu.core_type<tc>, window_params = [{transform_indices = @transform_0, window_bounds = array<i64: 64, 128>}, {pipeline_mode = #tpu.pipeline_mode<synchronous>, transform_indices = @transform_1, window_bounds = array<i64: 128, 128>}, {pipeline_mode = #tpu.pipeline_mode<synchronous>, transform_indices = @transform_2, window_bounds = array<i64: 128, 128>}, {pipeline_mode = #tpu.pipeline_mode<synchronous>, transform_indices = @transform_3, window_bounds = array<i64: 128, 128>}, {transform_indices = @transform_4, window_bounds = array<i64: 64, 128>}]} {
    %c0 = arith.constant 0 : index
    %c0_0 = arith.constant 0 : index
    %0 = vector.load %arg1[%c0, %c0_0] : memref<64x128xbf16, #tpu.memory_space<vmem>>, vector<64x128xbf16>
    %c0_1 = arith.constant 0 : index
    %c0_2 = arith.constant 0 : index
    %1 = vector.load %arg2[%c0_1, %c0_2] : memref<128x128xbf16, #tpu.memory_space<vmem>>, vector<128x128xbf16>
    %cst = arith.constant dense<0.000000e+00> : vector<64x128xf32>
    %2 = tpu.matmul %0, %1, %cst {dimension_numbers = #tpu.dot_dimension_numbers<[1], [0], [0], [1], [0, 0, 1, 1], [], []>} : vector<64x128xbf16>, vector<128x128xbf16>, vector<64x128xf32> -> vector<64x128xf32>
    %cst_3 = arith.constant 0.000000e+00 : f32
    %3 = vector.broadcast %cst_3 : f32 to vector<64x128xf32>
    %4 = arith.maximumf %2, %3 : vector<64x128xf32>
    %5 = arith.truncf %4 : vector<64x128xf32> to vector<64x128xbf16>
    %c0_4 = arith.constant 0 : index
    %c0_5 = arith.constant 0 : index
    %6 = vector.load %arg3[%c0_4, %c0_5] : memref<128x128xbf16, #tpu.memory_space<vmem>>, vector<128x128xbf16>
    %cst_6 = arith.constant dense<0.000000e+00> : vector<64x128xf32>
    %7 = tpu.matmul %5, %6, %cst_6 {dimension_numbers = #tpu.dot_dimension_numbers<[1], [0], [0], [1], [0, 0, 1, 1], [], []>} : vector<64x128xbf16>, vector<128x128xbf16>, vector<64x128xf32> -> vector<64x128xf32>
    %8 = arith.truncf %7 : vector<64x128xf32> to vector<64x128xbf16>
    %c0_7 = arith.constant 0 : index
    %c0_8 = arith.constant 0 : index
    %9 = vector.load %arg4[%c0_7, %c0_8] : memref<128x128xbf16, #tpu.memory_space<vmem>>, vector<128x128xbf16>
    %cst_9 = arith.constant dense<0.000000e+00> : vector<64x128xf32>
    %10 = tpu.matmul %8, %9, %cst_9 {dimension_numbers = #tpu.dot_dimension_numbers<[1], [0], [0], [1], [0, 0, 1, 1], [], []>} : vector<64x128xbf16>, vector<128x128xbf16>, vector<64x128xf32> -> vector<64x128xf32>
    %11 = arith.truncf %10 : vector<64x128xf32> to vector<64x128xbf16>
    %c0_10 = arith.constant 0 : index
    %c0_11 = arith.constant 0 : index
    %12 = vector.load %arg5[%c0_10, %c0_11] : memref<64x128xbf16, #tpu.memory_space<vmem>>, vector<64x128xbf16>
    tpu.vector_store %arg5[%c0_10, %c0_11], %11 {strides = array<i32>} : memref<64x128xbf16, #tpu.memory_space<vmem>>, vector<64x128xbf16>,
    return
  }
  func.func @transform_0(%arg0: i32) -> (i32, i32) {
    %c0_i32 = arith.constant 0 : i32
    %c0_i32_0 = arith.constant 0 : i32
    return %arg0, %c0_i32 : i32, i32
  }
  func.func @transform_1(%arg0: i32) -> (i32, i32) {
    %c0_i32 = arith.constant 0 : i32
    %c0_i32_0 = arith.constant 0 : i32
    %c0_i32_1 = arith.constant 0 : i32
    return %c0_i32, %c0_i32_0 : i32, i32
  }
  func.func @transform_2(%arg0: i32) -> (i32, i32) {
    %c0_i32 = arith.constant 0 : i32
    %c0_i32_0 = arith.constant 0 : i32
    %c0_i32_1 = arith.constant 0 : i32
    return %c0_i32, %c0_i32_0 : i32, i32
  }
  func.func @transform_3(%arg0: i32) -> (i32, i32) {
    %c0_i32 = arith.constant 0 : i32
    %c0_i32_0 = arith.constant 0 : i32
    %c0_i32_1 = arith.constant 0 : i32
    return %c0_i32, %c0_i32_0 : i32, i32
  }
  func.func @transform_4(%arg0: i32) -> (i32, i32) {
    %c0_i32 = arith.constant 0 : i32
    %c0_i32_0 = arith.constant 0 : i32
    return %arg0, %c0_i32 : i32, i32
  }
}

module attributes {stable_mosaic.version = 11 : i64} {
  func.func @_hop_kernel(%arg0: i32, %arg1: i32, %arg2: memref<64x128xbf16, #tpu.memory_space<vmem>>, %arg3: memref<128x128xbf16, #tpu.memory_space<vmem>>, %arg4: memref<1x128xf32, #tpu.memory_space<vmem>>, %arg5: memref<64x128xf32, #tpu.memory_space<vmem>>, %arg6: memref<64x128xf32, #tpu.memory_space<vmem>>) attributes {dimension_semantics = [#tpu.dimension_semantics<parallel>, #tpu.dimension_semantics<arbitrary>], iteration_bounds = array<i64: 2, 1>, scalar_prefetch = 0 : i64, scratch_operands = 1 : i64, tpu.core_type = #tpu.core_type<tc>, window_params = [{transform_indices = @transform_0, window_bounds = array<i64: 64, 128>}, {pipeline_mode = #tpu.pipeline_mode<synchronous>, transform_indices = @transform_1, window_bounds = array<i64: 128, 128>}, {pipeline_mode = #tpu.pipeline_mode<synchronous>, transform_indices = @transform_2, window_bounds = array<i64: 1, 128>}, {transform_indices = @transform_3, window_bounds = array<i64: 64, 128>}]} {
    %c0_i32 = arith.constant 0 : i32
    %0 = arith.cmpi eq, %arg1, %c0_i32 : i32
    %1 = arith.extui %0 : i1 to i32
    %c0_i32_0 = arith.constant 0 : i32
    %2 = arith.cmpi ne, %1, %c0_i32_0 : i32
    scf.if %2 {
      %cst_9 = arith.constant 0.000000e+00 : f32
      %15 = vector.broadcast %cst_9 : f32 to vector<64x128xf32>
      %c0_10 = arith.constant 0 : index
      %c0_11 = arith.constant 0 : index
      %16 = vector.load %arg6[%c0_10, %c0_11] : memref<64x128xf32, #tpu.memory_space<vmem>>, vector<64x128xf32>
      tpu.vector_store %arg6[%c0_10, %c0_11], %15 {strides = array<i32>} : memref<64x128xf32, #tpu.memory_space<vmem>>, vector<64x128xf32>,
    } else {
    }
    %c128_i32 = arith.constant 128 : i32
    %3 = arith.muli %arg1, %c128_i32 : i32
    %4 = tpu.assume_multiple %3, 128 : i32
    %5 = arith.index_cast %4 : i32 to index
    %c0 = arith.constant 0 : index
    %6 = vector.load %arg3[%5, %c0] : memref<128x128xbf16, #tpu.memory_space<vmem>>, vector<128x128xbf16>
    %c0_1 = arith.constant 0 : index
    %c0_2 = arith.constant 0 : index
    %7 = vector.load %arg6[%c0_1, %c0_2] : memref<64x128xf32, #tpu.memory_space<vmem>>, vector<64x128xf32>
    %c0_3 = arith.constant 0 : index
    %c0_4 = arith.constant 0 : index
    %8 = vector.load %arg2[%c0_3, %c0_4] : memref<64x128xbf16, #tpu.memory_space<vmem>>, vector<64x128xbf16>
    %cst = arith.constant dense<0.000000e+00> : vector<64x128xf32>
    %9 = tpu.matmul %8, %6, %cst {dimension_numbers = #tpu.dot_dimension_numbers<[1], [0], [0], [1], [0, 0, 1, 1], [], []>} : vector<64x128xbf16>, vector<128x128xbf16>, vector<64x128xf32> -> vector<64x128xf32>
    %10 = arith.addf %7, %9 : vector<64x128xf32>
    %c0_5 = arith.constant 0 : index
    %c0_6 = arith.constant 0 : index
    %11 = vector.load %arg6[%c0_5, %c0_6] : memref<64x128xf32, #tpu.memory_space<vmem>>, vector<64x128xf32>
    tpu.vector_store %arg6[%c0_5, %c0_6], %10 {strides = array<i32>} : memref<64x128xf32, #tpu.memory_space<vmem>>, vector<64x128xf32>,
    %c0_i32_7 = arith.constant 0 : i32
    %12 = arith.cmpi eq, %arg1, %c0_i32_7 : i32
    %13 = arith.extui %12 : i1 to i32
    %c0_i32_8 = arith.constant 0 : i32
    %14 = arith.cmpi ne, %13, %c0_i32_8 : i32
    scf.if %14 {
      %c0_9 = arith.constant 0 : index
      %c0_10 = arith.constant 0 : index
      %15 = vector.load %arg6[%c0_9, %c0_10] : memref<64x128xf32, #tpu.memory_space<vmem>>, vector<64x128xf32>
      %c0_11 = arith.constant 0 : index
      %c0_12 = arith.constant 0 : index
      %16 = vector.load %arg4[%c0_11, %c0_12] : memref<1x128xf32, #tpu.memory_space<vmem>>, vector<1x128xf32>
      %17 = vector.broadcast %16 : vector<1x128xf32> to vector<64x128xf32>
      %18 = arith.addf %15, %17 : vector<64x128xf32>
      %19 = tpu.iota {dimensions = array<i32: 1>} : vector<64x128xi32>
      %c8_i32 = arith.constant 8 : i32
      %20 = vector.broadcast %c8_i32 : i32 to vector<64x128xi32>
      %21 = arith.cmpi slt, %19, %20 : vector<64x128xi32>
      %cst_13 = arith.constant -1.000000e+30 : f32
      %22 = vector.broadcast %cst_13 : f32 to vector<64x128xf32>
      %23 = arith.select %21, %18, %22 : vector<64x128xi1>, vector<64x128xf32>
      %cst_14 = arith.constant dense<0xFF800000> : vector<64xf32>
      %24 = vector.multi_reduction <maximumf>, %23, %cst_14 [1] : vector<64x128xf32> to vector<64xf32>
      %25 = vector.shape_cast %24 : vector<64xf32> to vector<64x1xf32>
      %26 = vector.broadcast %25 : vector<64x1xf32> to vector<64x128xf32>
      %27 = arith.subf %23, %26 : vector<64x128xf32>
      %28 = math.exp %27 : vector<64x128xf32>
      %cst_15 = arith.constant dense<0.000000e+00> : vector<64xf32>
      %29 = vector.multi_reduction <add>, %28, %cst_15 [1] : vector<64x128xf32> to vector<64xf32>
      %30 = vector.shape_cast %29 : vector<64xf32> to vector<64x1xf32>
      %31 = math.log %30 : vector<64x1xf32>
      %32 = vector.broadcast %31 : vector<64x1xf32> to vector<64x128xf32>
      %33 = arith.subf %27, %32 : vector<64x128xf32>
      %c0_16 = arith.constant 0 : index
      %c0_17 = arith.constant 0 : index
      %34 = vector.load %arg5[%c0_16, %c0_17] : memref<64x128xf32, #tpu.memory_space<vmem>>, vector<64x128xf32>
      tpu.vector_store %arg5[%c0_16, %c0_17], %33 {strides = array<i32>} : memref<64x128xf32, #tpu.memory_space<vmem>>, vector<64x128xf32>,
    } else {
    }
    return
  }
  func.func @transform_0(%arg0: i32, %arg1: i32) -> (i32, i32) {
    %c0_i32 = arith.constant 0 : i32
    return %arg0, %arg1 : i32, i32
  }
  func.func @transform_1(%arg0: i32, %arg1: i32) -> (i32, i32) {
    %c0_i32 = arith.constant 0 : i32
    %c0_i32_0 = arith.constant 0 : i32
    %c0_i32_1 = arith.constant 0 : i32
    return %c0_i32, %c0_i32_0 : i32, i32
  }
  func.func @transform_2(%arg0: i32, %arg1: i32) -> (i32, i32) {
    %c0_i32 = arith.constant 0 : i32
    %c0_i32_0 = arith.constant 0 : i32
    %c0_i32_1 = arith.constant 0 : i32
    return %c0_i32, %c0_i32_0 : i32, i32
  }
  func.func @transform_3(%arg0: i32, %arg1: i32) -> (i32, i32) {
    %c0_i32 = arith.constant 0 : i32
    %c0_i32_0 = arith.constant 0 : i32
    return %arg0, %c0_i32 : i32, i32
  }
}

module attributes {stable_mosaic.version = 11 : i64} {
  func.func @_hop_kernel(%arg0: i32, %arg1: i32, %arg2: memref<64x128xbf16, #tpu.memory_space<vmem>>, %arg3: memref<128x128xbf16, #tpu.memory_space<vmem>>, %arg4: memref<1x128xf32, #tpu.memory_space<vmem>>, %arg5: memref<64x128xbf16, #tpu.memory_space<vmem>>, %arg6: memref<64x128xf32, #tpu.memory_space<vmem>>) attributes {dimension_semantics = [#tpu.dimension_semantics<parallel>, #tpu.dimension_semantics<arbitrary>], iteration_bounds = array<i64: 2, 1>, scalar_prefetch = 0 : i64, scratch_operands = 1 : i64, tpu.core_type = #tpu.core_type<tc>, window_params = [{transform_indices = @transform_0, window_bounds = array<i64: 64, 128>}, {pipeline_mode = #tpu.pipeline_mode<synchronous>, transform_indices = @transform_1, window_bounds = array<i64: 128, 128>}, {pipeline_mode = #tpu.pipeline_mode<synchronous>, transform_indices = @transform_2, window_bounds = array<i64: 1, 128>}, {transform_indices = @transform_3, window_bounds = array<i64: 64, 128>}]} {
    %c0_i32 = arith.constant 0 : i32
    %0 = arith.cmpi eq, %arg1, %c0_i32 : i32
    %1 = arith.extui %0 : i1 to i32
    %c0_i32_0 = arith.constant 0 : i32
    %2 = arith.cmpi ne, %1, %c0_i32_0 : i32
    scf.if %2 {
      %cst_9 = arith.constant 0.000000e+00 : f32
      %15 = vector.broadcast %cst_9 : f32 to vector<64x128xf32>
      %c0_10 = arith.constant 0 : index
      %c0_11 = arith.constant 0 : index
      %16 = vector.load %arg6[%c0_10, %c0_11] : memref<64x128xf32, #tpu.memory_space<vmem>>, vector<64x128xf32>
      tpu.vector_store %arg6[%c0_10, %c0_11], %15 {strides = array<i32>} : memref<64x128xf32, #tpu.memory_space<vmem>>, vector<64x128xf32>,
    } else {
    }
    %c128_i32 = arith.constant 128 : i32
    %3 = arith.muli %arg1, %c128_i32 : i32
    %4 = tpu.assume_multiple %3, 128 : i32
    %5 = arith.index_cast %4 : i32 to index
    %c0 = arith.constant 0 : index
    %6 = vector.load %arg3[%5, %c0] : memref<128x128xbf16, #tpu.memory_space<vmem>>, vector<128x128xbf16>
    %c0_1 = arith.constant 0 : index
    %c0_2 = arith.constant 0 : index
    %7 = vector.load %arg6[%c0_1, %c0_2] : memref<64x128xf32, #tpu.memory_space<vmem>>, vector<64x128xf32>
    %c0_3 = arith.constant 0 : index
    %c0_4 = arith.constant 0 : index
    %8 = vector.load %arg2[%c0_3, %c0_4] : memref<64x128xbf16, #tpu.memory_space<vmem>>, vector<64x128xbf16>
    %cst = arith.constant dense<0.000000e+00> : vector<64x128xf32>
    %9 = tpu.matmul %8, %6, %cst {dimension_numbers = #tpu.dot_dimension_numbers<[1], [0], [0], [1], [0, 0, 1, 1], [], []>} : vector<64x128xbf16>, vector<128x128xbf16>, vector<64x128xf32> -> vector<64x128xf32>
    %10 = arith.addf %7, %9 : vector<64x128xf32>
    %c0_5 = arith.constant 0 : index
    %c0_6 = arith.constant 0 : index
    %11 = vector.load %arg6[%c0_5, %c0_6] : memref<64x128xf32, #tpu.memory_space<vmem>>, vector<64x128xf32>
    tpu.vector_store %arg6[%c0_5, %c0_6], %10 {strides = array<i32>} : memref<64x128xf32, #tpu.memory_space<vmem>>, vector<64x128xf32>,
    %c0_i32_7 = arith.constant 0 : i32
    %12 = arith.cmpi eq, %arg1, %c0_i32_7 : i32
    %13 = arith.extui %12 : i1 to i32
    %c0_i32_8 = arith.constant 0 : i32
    %14 = arith.cmpi ne, %13, %c0_i32_8 : i32
    scf.if %14 {
      %c0_9 = arith.constant 0 : index
      %c0_10 = arith.constant 0 : index
      %15 = vector.load %arg6[%c0_9, %c0_10] : memref<64x128xf32, #tpu.memory_space<vmem>>, vector<64x128xf32>
      %c0_11 = arith.constant 0 : index
      %c0_12 = arith.constant 0 : index
      %16 = vector.load %arg4[%c0_11, %c0_12] : memref<1x128xf32, #tpu.memory_space<vmem>>, vector<1x128xf32>
      %17 = vector.broadcast %16 : vector<1x128xf32> to vector<64x128xf32>
      %18 = arith.addf %15, %17 : vector<64x128xf32>
      %19 = arith.truncf %18 : vector<64x128xf32> to vector<64x128xbf16>
      %c0_13 = arith.constant 0 : index
      %c0_14 = arith.constant 0 : index
      %20 = vector.load %arg5[%c0_13, %c0_14] : memref<64x128xbf16, #tpu.memory_space<vmem>>, vector<64x128xbf16>
      tpu.vector_store %arg5[%c0_13, %c0_14], %19 {strides = array<i32>} : memref<64x128xbf16, #tpu.memory_space<vmem>>, vector<64x128xbf16>,
    } else {
    }
    return
  }
  func.func @transform_0(%arg0: i32, %arg1: i32) -> (i32, i32) {
    %c0_i32 = arith.constant 0 : i32
    return %arg0, %arg1 : i32, i32
  }
  func.func @transform_1(%arg0: i32, %arg1: i32) -> (i32, i32) {
    %c0_i32 = arith.constant 0 : i32
    %c0_i32_0 = arith.constant 0 : i32
    %c0_i32_1 = arith.constant 0 : i32
    return %c0_i32, %c0_i32_0 : i32, i32
  }
  func.func @transform_2(%arg0: i32, %arg1: i32) -> (i32, i32) {
    %c0_i32 = arith.constant 0 : i32
    %c0_i32_0 = arith.constant 0 : i32
    %c0_i32_1 = arith.constant 0 : i32
    return %c0_i32, %c0_i32_0 : i32, i32
  }
  func.func @transform_3(%arg0: i32, %arg1: i32) -> (i32, i32) {
    %c0_i32 = arith.constant 0 : i32
    %c0_i32_0 = arith.constant 0 : i32
    return %arg0, %c0_i32 : i32, i32
  }
}

</mosaic_0001>

<llo_original>
// kernel: gcn_fs_forward.4
$region0: #{gcn_fs_forward.4}
  #allocation0 [shape = 'u32[]', space=smem, size = 0x4, offset = 0x4, fixed_abs, tag = 'smem constant byte address 0x4 - core index']
  #allocation1 [shape = 'u32[144,128]{1,0:T(1,128)}', space=vmem, size = 0x12000, scoped, tag = 'internal scratch']
  #allocation2 [shape = 'f32[64,128]{1,0:T(8,128)}', space=vmem, size = 0x8000, scoped, tag = 'scratch operand']
  %s0 = inlined_call_operand.vmem [shape: bf16[128,128], index: 0, kind: input, shape index: {}]
  %s1 = inlined_call_operand.vmem [shape: bf16[128,128], index: 1, kind: input, shape index: {}]
  %s2 = inlined_call_operand.vmem [shape: f32[1,128], index: 2, kind: input, shape index: {}]
  %s3 = inlined_call_operand.vmem [shape: bf16[128,128], index: 3, kind: output, shape index: {}]
  %s4 = sld [smem:[#allocation0]]
  $region53: #{gcn_fs_forward.4} parent=0
    _
  %s6 = ssub.s32 1, %s4
  %s7 = scalar_select 0, %s6, %s4
  loop: start=0, step=1, limit=4
  $region2: #{gcn_fs_forward.4} parent=0 // loop_pre_header
    _
  $region3: #{gcn_fs_forward.4} parent=0 // loop_header
    %s9 = sphi 0, %s13
    %p10 = scmp.ge.s32.totalorder %s9, 4
    %s16 = sphi 0, %s28
    %s17 = sphi 0, %s24
    %s18 = sphi 0, %s16
    %s19 = sphi 0, %s17
    %s20 = sphi 0, %s18
    %s21 = sphi 0, %s19
    %s33 = sphi 0, %s35
    %s36 = sphi 0, %s33
    %s37 = sphi 0, %s36
    %s53 = sphi 0, %s37
    %s57 = sphi 0, %s57
    %s59 = sphi 0, %s57
    %s60 = sphi 0, %s59
    %s74 = sphi 0, %s60
    %s78 = sphi 0, %s78
    %s80 = sphi 0, %s78
    %s81 = sphi 0, %s80
    %s95 = sphi 0, %s81
    %s101 = sphi 0, %s103
    %s104 = sphi 0, %s101
    %s105 = sphi 0, %s104
    %s121 = sphi 0, %s105
  $region4: #{gcn_fs_forward.4} parent=0 // loop_header_branch
    %12 = sbr.rel (%p10) target = $region8
  $region5: #{gcn_fs_forward.4} parent=0 // loop_body
    %s14 = ssub.s32 %s9, 1
    %s15 = ssub.s32 %s9, 2
    %s22 = sadd.s32 1, %s17
    %p23 = scmp.ge.s32.totalorder %s22, 1
    %s24 = scalar_select %p23, 0, %s22
    %s25 = sadd.s32 1, %s16
    %s26 = scalar_select %p23, %s25, %s16
    %p27 = scmp.ge.s32.totalorder %s26, 2
    %s28 = scalar_select %p27, 0, %s26
    %s29 = ssub.s32 %s16, %s28
    %s30 = ssub.s32 %s17, %s24
    %s31 = sor.u32 %s29, %s30
    %p32 = scmp.eq.s32.totalorder %s31, 0
    %s34 = sadd.s32 %s33, 1
    %s35 = scalar_select %p32, %s33, %s34
    %p38 = pneg %p32
    %p39 = scmp.eq.s32.totalorder %s9, 1
    %p40 = por %p38, %p39
    %p41 = scmp.ne.s32.totalorder %s33, %s36
    %p42 = scmp.eq.s32.totalorder %s9, 0
    %p43 = por %p41, %p42
    %p44 = scmp.ne.s32.totalorder %s33, %s36
    %p45 = scmp.eq.s32.totalorder %s14, 1
    %p46 = por %p44, %p45
    %p47 = scmp.ne.s32.totalorder %s36, %s37
    %p48 = scmp.eq.s32.totalorder %s14, 0
    %p49 = por %p47, %p48
    %p50 = scmp.ne.s32.totalorder %s36, %s37
    %p51 = scmp.eq.s32.totalorder %s15, 1
    %p52 = por %p50, %p51
    %p54 = scmp.ne.s32.totalorder %s37, %s53
    %p55 = scmp.eq.s32.totalorder %s15, 0
    %p56 = por %p54, %p55
    %s58 = sadd.s32 %s57, 1
    %p61 = scmp.eq.s32.totalorder %s9, 1
    %p62 = scmp.ne.s32.totalorder %s57, %s59
    %p63 = scmp.eq.s32.totalorder %s9, 0
    %p64 = por %p62, %p63
    %p65 = scmp.ne.s32.totalorder %s57, %s59
    %p66 = scmp.eq.s32.totalorder %s14, 1
    %p67 = por %p65, %p66
    %p68 = scmp.ne.s32.totalorder %s59, %s60
    %p69 = scmp.eq.s32.totalorder %s14, 0
    %p70 = por %p68, %p69
    %p71 = scmp.ne.s32.totalorder %s59, %s60
    %p72 = scmp.eq.s32.totalorder %s15, 1
    %p73 = por %p71, %p72
    %p75 = scmp.ne.s32.totalorder %s60, %s74
    %p76 = scmp.eq.s32.totalorder %s15, 0
    %p77 = por %p75, %p76
    %s79 = sadd.s32 %s78, 1
    %p82 = scmp.eq.s32.totalorder %s9, 1
    %p83 = scmp.ne.s32.totalorder %s78, %s80
    %p84 = scmp.eq.s32.totalorder %s9, 0
    %p85 = por %p83, %p84
    %p86 = scmp.ne.s32.totalorder %s78, %s80
    %p87 = scmp.eq.s32.totalorder %s14, 1
    %p88 = por %p86, %p87
    %p89 = scmp.ne.s32.totalorder %s80, %s81
    %p90 = scmp.eq.s32.totalorder %s14, 0
    %p91 = por %p89, %p90
    %p92 = scmp.ne.s32.totalorder %s80, %s81
    %p93 = scmp.eq.s32.totalorder %s15, 1
    %p94 = por %p92, %p93
    %p96 = scmp.ne.s32.totalorder %s81, %s95
    %p97 = scmp.eq.s32.totalorder %s15, 0
    %p98 = por %p96, %p97
    %s99 = ssub.s32 %s16, %s28
    %p100 = scmp.eq.s32.totalorder %s99, 0
    %s102 = sadd.s32 %s101, 1
    %s103 = scalar_select %p100, %s101, %s102
    %p106 = pneg %p100
    %p107 = scmp.eq.s32.totalorder %s9, 1
    %p108 = por %p106, %p107
    %p109 = scmp.ne.s32.totalorder %s101, %s104
    %p110 = scmp.eq.s32.totalorder %s9, 0
    %p111 = por %p109, %p110
    %p112 = scmp.ne.s32.totalorder %s101, %s104
    %p113 = scmp.eq.s32.totalorder %s14, 1
    %p114 = por %p112, %p113
    %p115 = scmp.ne.s32.totalorder %s104, %s105
    %p116 = scmp.eq.s32.totalorder %s14, 0
    %p117 = por %p115, %p116
    %p118 = scmp.ne.s32.totalorder %s104, %s105
    %p119 = scmp.eq.s32.totalorder %s15, 1
    %p120 = por %p118, %p119
    %p122 = scmp.ne.s32.totalorder %s105, %s121
    %p123 = scmp.eq.s32.totalorder %s15, 0
    %p124 = por %p122, %p123
    %p125 = scmp.le.s32.totalorder 1, %s9
    %p126 = scmp.lt.s32.totalorder %s9, 3
    %p127 = pnand %p125, %p126
    %p128 = pneg %p127
    // Predicated region
    $region9: #{gcn_fs_forward.4} parent=5 // pred_check
      _
    $region10: #{gcn_fs_forward.4} parent=5 // pred_check_branch
      %130 = sbr.rel (%p127) target = $region12
    $region11: #{gcn_fs_forward.4} parent=5 // pred_region
      %s131 = ssub.s32 %s9, 1
      // Predicated region
      $region13: #{gcn_fs_forward.4} parent=11 // pred_check
        %p132 = pneg %p70
      $region14: #{gcn_fs_forward.4} parent=11 // pred_check_branch
        %134 = sbr.rel (%p132) target = $region16
      $region15: #{gcn_fs_forward.4} parent=11 // pred_region
        _
      $region16: #{gcn_fs_forward.4} parent=11 // pred_fallthru
        _
      // Predicated region
      $region17: #{gcn_fs_forward.4} parent=11 // pred_check
        %p135 = pneg %p91
      $region18: #{gcn_fs_forward.4} parent=11 // pred_check_branch
        %137 = sbr.rel (%p135) target = $region20
      $region19: #{gcn_fs_forward.4} parent=11 // pred_region
        _
      $region20: #{gcn_fs_forward.4} parent=11 // pred_fallthru
        _
    $region12: #{gcn_fs_forward.4} parent=5 // pred_fallthru
      _
    %p138 = scmp.lt.s32.totalorder %s9, 2
    // Predicated region
    $region21: #{gcn_fs_forward.4} parent=5 // pred_check
      %p139 = pneg %p138
    $region22: #{gcn_fs_forward.4} parent=5 // pred_check_branch
      %141 = sbr.rel (%p139) target = $region24
    $region23: #{gcn_fs_forward.4} parent=5 // pred_region
      // Predicated region
      $region25: #{gcn_fs_forward.4} parent=23 // pred_check
        %p142 = pneg %p43
      $region26: #{gcn_fs_forward.4} parent=23 // pred_check_branch
        %144 = sbr.rel (%p142) target = $region28
      $region27: #{gcn_fs_forward.4} parent=23 // pred_region
        %s145 = smul.u32 8, %s16
        %p146 = scmp.lt.s32.totalorder %s145, 15
        %s147 = scalar_select %p146, %s145, 15
        %p148 = scmp.lt.s32.totalorder %s17, 0
        %s149 = scalar_select %p148, %s17, 0
        %s150 = sadd.s32 %s149, %s147
        %s151 = smul.addr %s150, 4
        %s152 = scalar_lea.vmem %s0, %s151
        %s153 = smul.u32 8, %s16
      $region28: #{gcn_fs_forward.4} parent=23 // pred_fallthru
        _
    $region24: #{gcn_fs_forward.4} parent=5 // pred_fallthru
      _
    %p154 = scmp.le.s32.totalorder 1, %s9
    %p155 = scmp.lt.s32.totalorder %s9, 3
    %p156 = pnand %p154, %p155
    %p157 = pneg %p156
    // Predicated region
    $region29: #{gcn_fs_forward.4} parent=5 // pred_check
      _
    $region30: #{gcn_fs_forward.4} parent=5 // pred_check_branch
      %159 = sbr.rel (%p156) target = $region32
    $region31: #{gcn_fs_forward.4} parent=5 // pred_region
      %s160 = ssub.s32 %s9, 1
      %s161 = smul.u32 8, %s18
      %p162 = scmp.lt.s32.totalorder %s161, 15
      %s163 = scalar_select %p162, %s161, 15
      %p164 = scmp.lt.s32.totalorder %s19, 0
      %s165 = scalar_select %p164, %s19, 0
      %s166 = sadd.s32 %s165, %s163
      %s167 = smul.addr %s166, 4
      %s168 = scalar_lea.vmem %s0, %s167
      %p169 = pneg %p49
      %p170 = pneg %p46
      %p171 = pneg %p70
      %p172 = pneg %p67
      %p173 = pneg %p91
      %p174 = pneg %p88
      %p175 = pneg %p117
      %p176 = pneg %p114
      %s177 = smul.u32 8, %s18
      %p178 = scmp.lt.s32.totalorder %s177, 15
      %s179 = scalar_select %p178, %s177, 15
      %s180 = smul.addr %s179, 4
      %s181 = scalar_lea.vmem %s3, %s180
      %s182 = smul.u32 8, %s18
      %p183 = scmp.lt.s32.totalorder %s182, 15
      %s184 = scalar_select %p183, %s182, 15
      %p185 = scmp.lt.s32.totalorder %s19, 0
      %s186 = scalar_select %p185, %s19, 0
      %s187 = sadd.s32 %s186, %s184
      %s188 = smul.addr %s187, 4
      %s189 = scalar_lea.vmem %s0, %s188
      %s190 = smul.u32 8, %s18
      %s191 = smul.u32 8, %s18
      %p192 = scmp.lt.s32.totalorder %s191, 15
      %s193 = scalar_select %p192, %s191, 15
      %s194 = smul.addr %s193, 4
      %s195 = scalar_lea.vmem %s3, %s194
      %s196 = smul.u32 8, %s18
      %p198 = scmp.eq.s32.totalorder %s19, 0
      // Predicated region
      $region33: #{gcn_fs_forward.4} parent=31 // pred_check
        %p199 = pneg %p198
      $region34: #{gcn_fs_forward.4} parent=31 // pred_check_branch
        %201 = sbr.rel (%p199) target = $region36
      $region35: #{gcn_fs_forward.4} parent=31 // pred_region
        %202 = vst [vmem:[#allocation2] sm:$0xff] 0.0
        %203 = vst [vmem:[#allocation2 + $0x8] sm:$0xff] 0.0
        %204 = vst [vmem:[#allocation2 + $0x10] sm:$0xff] 0.0
        %205 = vst [vmem:[#allocation2 + $0x18] sm:$0xff] 0.0
        %206 = vst [vmem:[#allocation2 + $0x20] sm:$0xff] 0.0
        %207 = vst [vmem:[#allocation2 + $0x28] sm:$0xff] 0.0
        %208 = vst [vmem:[#allocation2 + $0x30] sm:$0xff] 0.0
        %209 = vst [vmem:[#allocation2 + $0x38] sm:$0xff] 0.0
      $region36: #{gcn_fs_forward.4} parent=31 // pred_fallthru
        _
      %s210 = smul.u32 %s19, 128
      %s211 = sshra.s32 %s210, 3
      %s212 = sand.u32 %s210, 7
      %s213 = smul.addr %s211, 4
      %s214 = scalar_lea.vmem %s1, %s213
      %v215 = vld [vmem:[%s214] sm:$0xf]
      %v216 = vld [vmem:[%s214 + $0x4] sm:$0xf]
      %v217 = vld [vmem:[%s214 + $0x8] sm:$0xf]
      %v218 = vld [vmem:[%s214 + $0xc] sm:$0xf]
      %v219 = vld [vmem:[%s214 + $0x10] sm:$0xf]
      %v220 = vld [vmem:[%s214 + $0x14] sm:$0xf]
      %v221 = vld [vmem:[%s214 + $0x18] sm:$0xf]
      %v222 = vld [vmem:[%s214 + $0x1c] sm:$0xf]
      %v223 = vld [vmem:[%s214 + $0x20] sm:$0xf]
      %v224 = vld [vmem:[%s214 + $0x24] sm:$0xf]
      %v225 = vld [vmem:[%s214 + $0x28] sm:$0xf]
      %v226 = vld [vmem:[%s214 + $0x2c] sm:$0xf]
      %v227 = vld [vmem:[%s214 + $0x30] sm:$0xf]
      %v228 = vld [vmem:[%s214 + $0x34] sm:$0xf]
      %v229 = vld [vmem:[%s214 + $0x38] sm:$0xf]
      %v230 = vld [vmem:[%s214 + $0x3c] sm:$0xf]
      %v231 = vld [vmem:[#allocation2] sm:$0xff]
      %v232 = vld [vmem:[#allocation2 + $0x8] sm:$0xff]
      %v233 = vld [vmem:[#allocation2 + $0x10] sm:$0xff]
      %v234 = vld [vmem:[#allocation2 + $0x18] sm:$0xff]
      %v235 = vld [vmem:[#allocation2 + $0x20] sm:$0xff]
      %v236 = vld [vmem:[#allocation2 + $0x28] sm:$0xff]
      %v237 = vld [vmem:[#allocation2 + $0x30] sm:$0xff]
      %v238 = vld [vmem:[#allocation2 + $0x38] sm:$0xff]
      %v239 = vld [vmem:[%s189] sm:$0xf]
      %v240 = vld [vmem:[%s189 + $0x4] sm:$0xf]
      %v241 = vld [vmem:[%s189 + $0x8] sm:$0xf]
      %v242 = vld [vmem:[%s189 + $0xc] sm:$0xf]
      %v243 = vld [vmem:[%s189 + $0x10] sm:$0xf]
      %v244 = vld [vmem:[%s189 + $0x14] sm:$0xf]
      %v245 = vld [vmem:[%s189 + $0x18] sm:$0xf]
      %v246 = vld [vmem:[%s189 + $0x1c] sm:$0xf]
      %v255 = vunpack.c.l.b16 %v239
      %v256 = vunpack.c.l.b16 %v240
      %v257 = vunpack.c.l.b16 %v241
      %v258 = vunpack.c.l.b16 %v242
      %v259 = vunpack.c.l.b16 %v243
      %v260 = vunpack.c.l.b16 %v244
      %v261 = vunpack.c.l.b16 %v245
      %v262 = vunpack.c.l.b16 %v246
      %v263 = vpack.c.b16 %v256, %v255
      %v264 = vpack.c.b16 %v258, %v257
      %v265 = vpack.c.b16 %v260, %v259
      %v266 = vpack.c.b16 %v262, %v261
      %v287 = vunpack.c.l.b16 %v215
      %v288 = vunpack.c.l.b16 %v216
      %v289 = vunpack.c.l.b16 %v217
      %v290 = vunpack.c.l.b16 %v218
      %v291 = vunpack.c.l.b16 %v219
      %v292 = vunpack.c.l.b16 %v220
      %v293 = vunpack.c.l.b16 %v221
      %v294 = vunpack.c.l.b16 %v222
      %v295 = vunpack.c.l.b16 %v223
      %v296 = vunpack.c.l.b16 %v224
      %v297 = vunpack.c.l.b16 %v225
      %v298 = vunpack.c.l.b16 %v226
      %v299 = vunpack.c.l.b16 %v227
      %v300 = vunpack.c.l.b16 %v228
      %v301 = vunpack.c.l.b16 %v229
      %v302 = vunpack.c.l.b16 %v230
      %v303 = vpack.c.b16 %v288, %v287
      %v304 = vpack.c.b16 %v290, %v289
      %v305 = vpack.c.b16 %v292, %v291
      %v306 = vpack.c.b16 %v294, %v293
      %v307 = vpack.c.b16 %v296, %v295
      %v308 = vpack.c.b16 %v298, %v297
      %v309 = vpack.c.b16 %v300, %v299
      %v310 = vpack.c.b16 %v302, %v301
      %319 = vmatprep.subr.bf16.mxu0 0
      %320 = vmatpush1.bf16.msra.mxu0 %v310
      %321 = vmatprep.subr.bf16.mxu0 0
      %322 = vmatpush1.bf16.msra.mxu0 %v309
      %323 = vmatprep.subr.bf16.mxu0 0
      %324 = vmatpush1.bf16.msra.mxu0 %v308
      %325 = vmatprep.subr.bf16.mxu0 0
      %326 = vmatpush1.bf16.msra.mxu0 %v307
      %327 = vmatprep.subr.bf16.mxu0 0
      %328 = vmatpush1.bf16.msra.mxu0 %v306
      %329 = vmatprep.subr.bf16.mxu0 0
      %330 = vmatpush1.bf16.msra.mxu0 %v305
      %331 = vmatprep.subr.bf16.mxu0 0
      %332 = vmatpush1.bf16.msra.mxu0 %v304
      %333 = vmatprep.subr.bf16.mxu0 0
      %334 = vmatpush1.bf16.msra.mxu0 %v303
      %335 = vmatprep.subr.bf16.mxu0 0
      %336 = vmatpush2.bf16.msra.mxu0 0
      %337 = vmatprep.subr.bf16.mxu0 0
      %338 = vmatpush2.bf16.msra.mxu0 0
      %339 = vmatprep.subr.bf16.mxu0 0
      %340 = vmatpush2.bf16.msra.mxu0 0
      %341 = vmatprep.subr.bf16.mxu0 0
      %342 = vmatpush2.bf16.msra.mxu0 0
      %343 = vmatprep.subr.bf16.mxu0 0
      %344 = vmatpush2.bf16.msra.mxu0 0
      %345 = vmatprep.subr.bf16.mxu0 0
      %346 = vmatpush2.bf16.msra.mxu0 0
      %347 = vmatprep.subr.bf16.mxu0 0
      %348 = vmatpush2.bf16.msra.mxu0 0
      %349 = vmatprep.subr.bf16.mxu0 0
      %350 = vmatpush2.bf16.msra.mxu0 0
      %351 = vmatprep.mubr.bf16.mxu0 0
      %352 = vmatmul.mubr.bf16.gmra.mxu0 %v263
      %v353 = vpop.f32.mrf.mxu0
      %v354 = vadd.f32 0.0, %v353
      %v355 = vpop.f32.mrf.mxu0
      %v356 = vpop.f32.mrf.mxu0
      %v357 = vadd.f32 0.0, %v356
      %v358 = vpop.f32.mrf.mxu0
      %359 = vmatprep.mubr.bf16.mxu0 0
      %360 = vmatmul.mubr.bf16.gmra.mxu0 %v264
      %v361 = vpop.f32.mrf.mxu0
      %v362 = vadd.f32 0.0, %v361
      %v363 = vpop.f32.mrf.mxu0
      %v364 = vpop.f32.mrf.mxu0
      %v365 = vadd.f32 0.0, %v364
      %v366 = vpop.f32.mrf.mxu0
      %367 = vmatprep.mubr.bf16.mxu0 0
      %368 = vmatmul.mubr.bf16.gmra.mxu0 %v265
      %v369 = vpop.f32.mrf.mxu0
      %v370 = vadd.f32 0.0, %v369
      %v371 = vpop.f32.mrf.mxu0
      %v372 = vpop.f32.mrf.mxu0
      %v373 = vadd.f32 0.0, %v372
      %v374 = vpop.f32.mrf.mxu0
      %375 = vmatprep.mubr.bf16.mxu0 0
      %376 = vmatmul.mubr.bf16.gmra.mxu0 %v266
      %v377 = vpop.f32.mrf.mxu0
      %v378 = vadd.f32 0.0, %v377
      %v379 = vpop.f32.mrf.mxu0
      %v380 = vpop.f32.mrf.mxu0
      %v381 = vadd.f32 0.0, %v380
      %v382 = vpop.f32.mrf.mxu0
      %383 = vdwg.mxu0
      %v384 = vadd.f32 %v231, %v354
      %v385 = vadd.f32 %v232, %v357
      %v386 = vadd.f32 %v233, %v362
      %v387 = vadd.f32 %v234, %v365
      %v388 = vadd.f32 %v235, %v370
      %v389 = vadd.f32 %v236, %v373
      %v390 = vadd.f32 %v237, %v378
      %v391 = vadd.f32 %v238, %v381
      %392 = vst [vmem:[#allocation2] sm:$0xff] %v384
      %393 = vst [vmem:[#allocation2 + $0x8] sm:$0xff] %v385
      %394 = vst [vmem:[#allocation2 + $0x10] sm:$0xff] %v386
      %395 = vst [vmem:[#allocation2 + $0x18] sm:$0xff] %v387
      %396 = vst [vmem:[#allocation2 + $0x20] sm:$0xff] %v388
      %397 = vst [vmem:[#allocation2 + $0x28] sm:$0xff] %v389
      %398 = vst [vmem:[#allocation2 + $0x30] sm:$0xff] %v390
      %399 = vst [vmem:[#allocation2 + $0x38] sm:$0xff] %v391
      // Predicated region
      $region37: #{gcn_fs_forward.4} parent=31 // pred_check
        %p400 = pneg %p198
      $region38: #{gcn_fs_forward.4} parent=31 // pred_check_branch
        %402 = sbr.rel (%p400) target = $region40
      $region39: #{gcn_fs_forward.4} parent=31 // pred_region
        %v403 = vld [vmem:[#allocation2] sm:$0xff]
        %v404 = vld [vmem:[#allocation2 + $0x8] sm:$0xff]
        %v405 = vld [vmem:[#allocation2 + $0x10] sm:$0xff]
        %v406 = vld [vmem:[#allocation2 + $0x18] sm:$0xff]
        %v407 = vld [vmem:[#allocation2 + $0x20] sm:$0xff]
        %v408 = vld [vmem:[#allocation2 + $0x28] sm:$0xff]
        %v409 = vld [vmem:[#allocation2 + $0x30] sm:$0xff]
        %v410 = vld [vmem:[#allocation2 + $0x38] sm:$0xff]
        %v411 = vld [vmem:[%s2] sm:$0x1]
        %v413 = vlaneseq
        %v414 = vshrl.u32 %v413, 7
        %v415 = vsub.s32 0, %v414
        %v416 = vrot.slane %v411, %v415
        %v418 = vadd.f32 %v403, %v416
        %v419 = vadd.f32 %v404, %v416
        %v420 = vadd.f32 %v405, %v416
        %v421 = vadd.f32 %v406, %v416
        %v422 = vadd.f32 %v407, %v416
        %v423 = vadd.f32 %v408, %v416
        %v424 = vadd.f32 %v409, %v416
        %v425 = vadd.f32 %v410, %v416
        %v426 = vpack.c.bf16 %v419, %v418
        %v427 = vpack.c.bf16 %v421, %v420
        %v428 = vpack.c.bf16 %v423, %v422
        %v429 = vpack.c.bf16 %v425, %v424
        %v434 = vunpack.c.l.b16 %v426
        %v435 = vunpack.c.h.b16 %v426
        %v436 = vunpack.c.l.b16 %v427
        %v437 = vunpack.c.h.b16 %v427
        %v438 = vunpack.c.l.b16 %v428
        %v439 = vunpack.c.h.b16 %v428
        %v440 = vunpack.c.l.b16 %v429
        %v441 = vunpack.c.h.b16 %v429
        %v442 = vpack.c.b16 %v434, %v434
        %v443 = vpack.c.b16 %v435, %v435
        %v444 = vpack.c.b16 %v436, %v436
        %v445 = vpack.c.b16 %v437, %v437
        %v446 = vpack.c.b16 %v438, %v438
        %v447 = vpack.c.b16 %v439, %v439
        %v448 = vpack.c.b16 %v440, %v440
        %v449 = vpack.c.b16 %v441, %v441
        %458 = vst [vmem:[%s195] sm:$0xf] %v442
        %459 = vst [vmem:[%s195 + $0x4] sm:$0xf] %v443
        %460 = vst [vmem:[%s195 + $0x8] sm:$0xf] %v444
        %461 = vst [vmem:[%s195 + $0xc] sm:$0xf] %v445
        %462 = vst [vmem:[%s195 + $0x10] sm:$0xf] %v446
        %463 = vst [vmem:[%s195 + $0x14] sm:$0xf] %v447
        %464 = vst [vmem:[%s195 + $0x18] sm:$0xf] %v448
        %465 = vst [vmem:[%s195 + $0x1c] sm:$0xf] %v449
      $region40: #{gcn_fs_forward.4} parent=31 // pred_fallthru
        _
      %s466 = smul.u32 8, %s18
      %p467 = scmp.lt.s32.totalorder %s466, 15
      %s468 = scalar_select %p467, %s466, 15
      %s469 = smul.addr %s468, 4
      %s470 = scalar_lea.vmem %s3, %s469
      // Predicated region
      $region41: #{gcn_fs_forward.4} parent=31 // pred_check
        %p471 = pneg %p114
      $region42: #{gcn_fs_forward.4} parent=31 // pred_check_branch
        %473 = sbr.rel (%p471) target = $region44
      $region43: #{gcn_fs_forward.4} parent=31 // pred_region
        %s474 = smul.u32 8, %s18
      $region44: #{gcn_fs_forward.4} parent=31 // pred_fallthru
        _
    $region32: #{gcn_fs_forward.4} parent=5 // pred_fallthru
      _
    %p475 = scmp.le.s32.totalorder 2, %s9
    // Predicated region
    $region45: #{gcn_fs_forward.4} parent=5 // pred_check
      %p476 = pneg %p475
    $region46: #{gcn_fs_forward.4} parent=5 // pred_check_branch
      %478 = sbr.rel (%p476) target = $region48
    $region47: #{gcn_fs_forward.4} parent=5 // pred_region
      %s479 = ssub.s32 %s9, 2
      // Predicated region
      $region49: #{gcn_fs_forward.4} parent=47 // pred_check
        %p480 = pneg %p120
      $region50: #{gcn_fs_forward.4} parent=47 // pred_check_branch
        %482 = sbr.rel (%p480) target = $region52
      $region51: #{gcn_fs_forward.4} parent=47 // pred_region
        %s483 = smul.u32 8, %s20
        %p484 = scmp.lt.s32.totalorder %s483, 15
        %s485 = scalar_select %p484, %s483, 15
        %s486 = smul.addr %s485, 4
        %s487 = scalar_lea.vmem %s3, %s486
      $region52: #{gcn_fs_forward.4} parent=47 // pred_fallthru
        _
    $region48: #{gcn_fs_forward.4} parent=5 // pred_fallthru
      _
  $region6: #{gcn_fs_forward.4} parent=0 // loop_footer
    %s13 = sadd.s32 1, %s9
  $region7: #{gcn_fs_forward.4} parent=0 // loop_footer_branch
    %8 = sbr.rel target = $region3
  $region8: #{gcn_fs_forward.4} parent=0 // loop_exit
    _

// kernel: gcn_fs_forward.5
$region0: #{gcn_fs_forward.5}
  #allocation0 [shape = 'u32[]', space=smem, size = 0x4, offset = 0x4, fixed_abs, tag = 'smem constant byte address 0x4 - core index']
  #allocation1 [shape = 'u32[144,128]{1,0:T(1,128)}', space=vmem, size = 0x12000, scoped, tag = 'internal scratch']
  #allocation2 [shape = 'f32[64,128]{1,0:T(8,128)}', space=vmem, size = 0x8000, scoped, tag = 'scratch operand']
  %s0 = inlined_call_operand.vmem [shape: bf16[128,128], index: 0, kind: input, shape index: {}]
  %s1 = inlined_call_operand.vmem [shape: bf16[128,128], index: 1, kind: input, shape index: {}]
  %s2 = inlined_call_operand.vmem [shape: f32[1,128], index: 2, kind: input, shape index: {}]
  %s3 = inlined_call_operand.vmem [shape: f32[128,128], index: 3, kind: output, shape index: {}]
  %s4 = sld [smem:[#allocation0]]
  $region53: #{gcn_fs_forward.5} parent=0
    _
  %s6 = ssub.s32 1, %s4
  %s7 = scalar_select 0, %s6, %s4
  loop: start=0, step=1, limit=4
  $region2: #{gcn_fs_forward.5} parent=0 // loop_pre_header
    _
  $region3: #{gcn_fs_forward.5} parent=0 // loop_header
    %s9 = sphi 0, %s13
    %p10 = scmp.ge.s32.totalorder %s9, 4
    %s16 = sphi 0, %s28
    %s17 = sphi 0, %s24
    %s18 = sphi 0, %s16
    %s19 = sphi 0, %s17
    %s20 = sphi 0, %s18
    %s21 = sphi 0, %s19
    %s33 = sphi 0, %s35
    %s36 = sphi 0, %s33
    %s37 = sphi 0, %s36
    %s53 = sphi 0, %s37
    %s57 = sphi 0, %s57
    %s59 = sphi 0, %s57
    %s60 = sphi 0, %s59
    %s74 = sphi 0, %s60
    %s78 = sphi 0, %s78
    %s80 = sphi 0, %s78
    %s81 = sphi 0, %s80
    %s95 = sphi 0, %s81
    %s101 = sphi 0, %s103
    %s104 = sphi 0, %s101
    %s105 = sphi 0, %s104
    %s121 = sphi 0, %s105
  $region4: #{gcn_fs_forward.5} parent=0 // loop_header_branch
    %12 = sbr.rel (%p10) target = $region8
  $region5: #{gcn_fs_forward.5} parent=0 // loop_body
    %s14 = ssub.s32 %s9, 1
    %s15 = ssub.s32 %s9, 2
    %s22 = sadd.s32 1, %s17
    %p23 = scmp.ge.s32.totalorder %s22, 1
    %s24 = scalar_select %p23, 0, %s22
    %s25 = sadd.s32 1, %s16
    %s26 = scalar_select %p23, %s25, %s16
    %p27 = scmp.ge.s32.totalorder %s26, 2
    %s28 = scalar_select %p27, 0, %s26
    %s29 = ssub.s32 %s16, %s28
    %s30 = ssub.s32 %s17, %s24
    %s31 = sor.u32 %s29, %s30
    %p32 = scmp.eq.s32.totalorder %s31, 0
    %s34 = sadd.s32 %s33, 1
    %s35 = scalar_select %p32, %s33, %s34
    %p38 = pneg %p32
    %p39 = scmp.eq.s32.totalorder %s9, 1
    %p40 = por %p38, %p39
    %p41 = scmp.ne.s32.totalorder %s33, %s36
    %p42 = scmp.eq.s32.totalorder %s9, 0
    %p43 = por %p41, %p42
    %p44 = scmp.ne.s32.totalorder %s33, %s36
    %p45 = scmp.eq.s32.totalorder %s14, 1
    %p46 = por %p44, %p45
    %p47 = scmp.ne.s32.totalorder %s36, %s37
    %p48 = scmp.eq.s32.totalorder %s14, 0
    %p49 = por %p47, %p48
    %p50 = scmp.ne.s32.totalorder %s36, %s37
    %p51 = scmp.eq.s32.totalorder %s15, 1
    %p52 = por %p50, %p51
    %p54 = scmp.ne.s32.totalorder %s37, %s53
    %p55 = scmp.eq.s32.totalorder %s15, 0
    %p56 = por %p54, %p55
    %s58 = sadd.s32 %s57, 1
    %p61 = scmp.eq.s32.totalorder %s9, 1
    %p62 = scmp.ne.s32.totalorder %s57, %s59
    %p63 = scmp.eq.s32.totalorder %s9, 0
    %p64 = por %p62, %p63
    %p65 = scmp.ne.s32.totalorder %s57, %s59
    %p66 = scmp.eq.s32.totalorder %s14, 1
    %p67 = por %p65, %p66
    %p68 = scmp.ne.s32.totalorder %s59, %s60
    %p69 = scmp.eq.s32.totalorder %s14, 0
    %p70 = por %p68, %p69
    %p71 = scmp.ne.s32.totalorder %s59, %s60
    %p72 = scmp.eq.s32.totalorder %s15, 1
    %p73 = por %p71, %p72
    %p75 = scmp.ne.s32.totalorder %s60, %s74
    %p76 = scmp.eq.s32.totalorder %s15, 0
    %p77 = por %p75, %p76
    %s79 = sadd.s32 %s78, 1
    %p82 = scmp.eq.s32.totalorder %s9, 1
    %p83 = scmp.ne.s32.totalorder %s78, %s80
    %p84 = scmp.eq.s32.totalorder %s9, 0
    %p85 = por %p83, %p84
    %p86 = scmp.ne.s32.totalorder %s78, %s80
    %p87 = scmp.eq.s32.totalorder %s14, 1
    %p88 = por %p86, %p87
    %p89 = scmp.ne.s32.totalorder %s80, %s81
    %p90 = scmp.eq.s32.totalorder %s14, 0
    %p91 = por %p89, %p90
    %p92 = scmp.ne.s32.totalorder %s80, %s81
    %p93 = scmp.eq.s32.totalorder %s15, 1
    %p94 = por %p92, %p93
    %p96 = scmp.ne.s32.totalorder %s81, %s95
    %p97 = scmp.eq.s32.totalorder %s15, 0
    %p98 = por %p96, %p97
    %s99 = ssub.s32 %s16, %s28
    %p100 = scmp.eq.s32.totalorder %s99, 0
    %s102 = sadd.s32 %s101, 1
    %s103 = scalar_select %p100, %s101, %s102
    %p106 = pneg %p100
    %p107 = scmp.eq.s32.totalorder %s9, 1
    %p108 = por %p106, %p107
    %p109 = scmp.ne.s32.totalorder %s101, %s104
    %p110 = scmp.eq.s32.totalorder %s9, 0
    %p111 = por %p109, %p110
    %p112 = scmp.ne.s32.totalorder %s101, %s104
    %p113 = scmp.eq.s32.totalorder %s14, 1
    %p114 = por %p112, %p113
    %p115 = scmp.ne.s32.totalorder %s104, %s105
    %p116 = scmp.eq.s32.totalorder %s14, 0
    %p117 = por %p115, %p116
    %p118 = scmp.ne.s32.totalorder %s104, %s105
    %p119 = scmp.eq.s32.totalorder %s15, 1
    %p120 = por %p118, %p119
    %p122 = scmp.ne.s32.totalorder %s105, %s121
    %p123 = scmp.eq.s32.totalorder %s15, 0
    %p124 = por %p122, %p123
    %p125 = scmp.le.s32.totalorder 1, %s9
    %p126 = scmp.lt.s32.totalorder %s9, 3
    %p127 = pnand %p125, %p126
    %p128 = pneg %p127
    // Predicated region
    $region9: #{gcn_fs_forward.5} parent=5 // pred_check
      _
    $region10: #{gcn_fs_forward.5} parent=5 // pred_check_branch
      %130 = sbr.rel (%p127) target = $region12
    $region11: #{gcn_fs_forward.5} parent=5 // pred_region
      %s131 = ssub.s32 %s9, 1
      // Predicated region
      $region13: #{gcn_fs_forward.5} parent=11 // pred_check
        %p132 = pneg %p70
      $region14: #{gcn_fs_forward.5} parent=11 // pred_check_branch
        %134 = sbr.rel (%p132) target = $region16
      $region15: #{gcn_fs_forward.5} parent=11 // pred_region
        _
      $region16: #{gcn_fs_forward.5} parent=11 // pred_fallthru
        _
      // Predicated region
      $region17: #{gcn_fs_forward.5} parent=11 // pred_check
        %p135 = pneg %p91
      $region18: #{gcn_fs_forward.5} parent=11 // pred_check_branch
        %137 = sbr.rel (%p135) target = $region20
      $region19: #{gcn_fs_forward.5} parent=11 // pred_region
        _
      $region20: #{gcn_fs_forward.5} parent=11 // pred_fallthru
        _
    $region12: #{gcn_fs_forward.5} parent=5 // pred_fallthru
      _
    %p138 = scmp.lt.s32.totalorder %s9, 2
    // Predicated region
    $region21: #{gcn_fs_forward.5} parent=5 // pred_check
      %p139 = pneg %p138
    $region22: #{gcn_fs_forward.5} parent=5 // pred_check_branch
      %141 = sbr.rel (%p139) target = $region24
    $region23: #{gcn_fs_forward.5} parent=5 // pred_region
      // Predicated region
      $region25: #{gcn_fs_forward.5} parent=23 // pred_check
        %p142 = pneg %p43
      $region26: #{gcn_fs_forward.5} parent=23 // pred_check_branch
        %144 = sbr.rel (%p142) target = $region28
      $region27: #{gcn_fs_forward.5} parent=23 // pred_region
        %s145 = smul.u32 8, %s16
        %p146 = scmp.lt.s32.totalorder %s145, 15
        %s147 = scalar_select %p146, %s145, 15
        %p148 = scmp.lt.s32.totalorder %s17, 0
        %s149 = scalar_select %p148, %s17, 0
        %s150 = sadd.s32 %s149, %s147
        %s151 = smul.addr %s150, 4
        %s152 = scalar_lea.vmem %s0, %s151
        %s153 = smul.u32 8, %s16
      $region28: #{gcn_fs_forward.5} parent=23 // pred_fallthru
        _
    $region24: #{gcn_fs_forward.5} parent=5 // pred_fallthru
      _
    %p154 = scmp.le.s32.totalorder 1, %s9
    %p155 = scmp.lt.s32.totalorder %s9, 3
    %p156 = pnand %p154, %p155
    %p157 = pneg %p156
    // Predicated region
    $region29: #{gcn_fs_forward.5} parent=5 // pred_check
      _
    $region30: #{gcn_fs_forward.5} parent=5 // pred_check_branch
      %159 = sbr.rel (%p156) target = $region32
    $region31: #{gcn_fs_forward.5} parent=5 // pred_region
      %s160 = ssub.s32 %s9, 1
      %s161 = smul.u32 8, %s18
      %p162 = scmp.lt.s32.totalorder %s161, 15
      %s163 = scalar_select %p162, %s161, 15
      %p164 = scmp.lt.s32.totalorder %s19, 0
      %s165 = scalar_select %p164, %s19, 0
      %s166 = sadd.s32 %s165, %s163
      %s167 = smul.addr %s166, 4
      %s168 = scalar_lea.vmem %s0, %s167
      %p169 = pneg %p49
      %p170 = pneg %p46
      %p171 = pneg %p70
      %p172 = pneg %p67
      %p173 = pneg %p91
      %p174 = pneg %p88
      %p175 = pneg %p117
      %p176 = pneg %p114
      %s177 = smul.u32 8, %s18
      %p178 = scmp.lt.s32.totalorder %s177, 15
      %s179 = scalar_select %p178, %s177, 15
      %s180 = smul.addr %s179, 8
      %s181 = scalar_lea.vmem %s3, %s180
      %s182 = smul.u32 8, %s18
      %p183 = scmp.lt.s32.totalorder %s182, 15
      %s184 = scalar_select %p183, %s182, 15
      %p185 = scmp.lt.s32.totalorder %s19, 0
      %s186 = scalar_select %p185, %s19, 0
      %s187 = sadd.s32 %s186, %s184
      %s188 = smul.addr %s187, 4
      %s189 = scalar_lea.vmem %s0, %s188
      %s190 = smul.u32 8, %s18
      %s191 = smul.u32 8, %s18
      %p192 = scmp.lt.s32.totalorder %s191, 15
      %s193 = scalar_select %p192, %s191, 15
      %s194 = smul.addr %s193, 8
      %s195 = scalar_lea.vmem %s3, %s194
      %s196 = smul.u32 8, %s18
      %p198 = scmp.eq.s32.totalorder %s19, 0
      // Predicated region
      $region33: #{gcn_fs_forward.5} parent=31 // pred_check
        %p199 = pneg %p198
      $region34: #{gcn_fs_forward.5} parent=31 // pred_check_branch
        %201 = sbr.rel (%p199) target = $region36
      $region35: #{gcn_fs_forward.5} parent=31 // pred_region
        %202 = vst [vmem:[#allocation2] sm:$0xff] 0.0
        %203 = vst [vmem:[#allocation2 + $0x8] sm:$0xff] 0.0
        %204 = vst [vmem:[#allocation2 + $0x10] sm:$0xff] 0.0
        %205 = vst [vmem:[#allocation2 + $0x18] sm:$0xff] 0.0
        %206 = vst [vmem:[#allocation2 + $0x20] sm:$0xff] 0.0
        %207 = vst [vmem:[#allocation2 + $0x28] sm:$0xff] 0.0
        %208 = vst [vmem:[#allocation2 + $0x30] sm:$0xff] 0.0
        %209 = vst [vmem:[#allocation2 + $0x38] sm:$0xff] 0.0
      $region36: #{gcn_fs_forward.5} parent=31 // pred_fallthru
        _
      %s210 = smul.u32 %s19, 128
      %s211 = sshra.s32 %s210, 3
      %s212 = sand.u32 %s210, 7
      %s213 = smul.addr %s211, 4
      %s214 = scalar_lea.vmem %s1, %s213
      %v215 = vld [vmem:[%s214] sm:$0xf]
      %v216 = vld [vmem:[%s214 + $0x4] sm:$0xf]
      %v217 = vld [vmem:[%s214 + $0x8] sm:$0xf]
      %v218 = vld [vmem:[%s214 + $0xc] sm:$0xf]
      %v219 = vld [vmem:[%s214 + $0x10] sm:$0xf]
      %v220 = vld [vmem:[%s214 + $0x14] sm:$0xf]
      %v221 = vld [vmem:[%s214 + $0x18] sm:$0xf]
      %v222 = vld [vmem:[%s214 + $0x1c] sm:$0xf]
      %v223 = vld [vmem:[%s214 + $0x20] sm:$0xf]
      %v224 = vld [vmem:[%s214 + $0x24] sm:$0xf]
      %v225 = vld [vmem:[%s214 + $0x28] sm:$0xf]
      %v226 = vld [vmem:[%s214 + $0x2c] sm:$0xf]
      %v227 = vld [vmem:[%s214 + $0x30] sm:$0xf]
      %v228 = vld [vmem:[%s214 + $0x34] sm:$0xf]
      %v229 = vld [vmem:[%s214 + $0x38] sm:$0xf]
      %v230 = vld [vmem:[%s214 + $0x3c] sm:$0xf]
      %v231 = vld [vmem:[#allocation2] sm:$0xff]
      %v232 = vld [vmem:[#allocation2 + $0x8] sm:$0xff]
      %v233 = vld [vmem:[#allocation2 + $0x10] sm:$0xff]
      %v234 = vld [vmem:[#allocation2 + $0x18] sm:$0xff]
      %v235 = vld [vmem:[#allocation2 + $0x20] sm:$0xff]
      %v236 = vld [vmem:[#allocation2 + $0x28] sm:$0xff]
      %v237 = vld [vmem:[#allocation2 + $0x30] sm:$0xff]
      %v238 = vld [vmem:[#allocation2 + $0x38] sm:$0xff]
      %v239 = vld [vmem:[%s189] sm:$0xf]
      %v240 = vld [vmem:[%s189 + $0x4] sm:$0xf]
      %v241 = vld [vmem:[%s189 + $0x8] sm:$0xf]
      %v242 = vld [vmem:[%s189 + $0xc] sm:$0xf]
      %v243 = vld [vmem:[%s189 + $0x10] sm:$0xf]
      %v244 = vld [vmem:[%s189 + $0x14] sm:$0xf]
      %v245 = vld [vmem:[%s189 + $0x18] sm:$0xf]
      %v246 = vld [vmem:[%s189 + $0x1c] sm:$0xf]
      %v255 = vunpack.c.l.b16 %v239
      %v256 = vunpack.c.l.b16 %v240
      %v257 = vunpack.c.l.b16 %v241
      %v258 = vunpack.c.l.b16 %v242
      %v259 = vunpack.c.l.b16 %v243
      %v260 = vunpack.c.l.b16 %v244
      %v261 = vunpack.c.l.b16 %v245
      %v262 = vunpack.c.l.b16 %v246
      %v263 = vpack.c.b16 %v256, %v255
      %v264 = vpack.c.b16 %v258, %v257
      %v265 = vpack.c.b16 %v260, %v259
      %v266 = vpack.c.b16 %v262, %v261
      %v287 = vunpack.c.l.b16 %v215
      %v288 = vunpack.c.l.b16 %v216
      %v289 = vunpack.c.l.b16 %v217
      %v290 = vunpack.c.l.b16 %v218
      %v291 = vunpack.c.l.b16 %v219
      %v292 = vunpack.c.l.b16 %v220
      %v293 = vunpack.c.l.b16 %v221
      %v294 = vunpack.c.l.b16 %v222
      %v295 = vunpack.c.l.b16 %v223
      %v296 = vunpack.c.l.b16 %v224
      %v297 = vunpack.c.l.b16 %v225
      %v298 = vunpack.c.l.b16 %v226
      %v299 = vunpack.c.l.b16 %v227
      %v300 = vunpack.c.l.b16 %v228
      %v301 = vunpack.c.l.b16 %v229
      %v302 = vunpack.c.l.b16 %v230
      %v303 = vpack.c.b16 %v288, %v287
      %v304 = vpack.c.b16 %v290, %v289
      %v305 = vpack.c.b16 %v292, %v291
      %v306 = vpack.c.b16 %v294, %v293
      %v307 = vpack.c.b16 %v296, %v295
      %v308 = vpack.c.b16 %v298, %v297
      %v309 = vpack.c.b16 %v300, %v299
      %v310 = vpack.c.b16 %v302, %v301
      %319 = vmatprep.subr.bf16.mxu0 0
      %320 = vmatpush1.bf16.msra.mxu0 %v310
      %321 = vmatprep.subr.bf16.mxu0 0
      %322 = vmatpush1.bf16.msra.mxu0 %v309
      %323 = vmatprep.subr.bf16.mxu0 0
      %324 = vmatpush1.bf16.msra.mxu0 %v308
      %325 = vmatprep.subr.bf16.mxu0 0
      %326 = vmatpush1.bf16.msra.mxu0 %v307
      %327 = vmatprep.subr.bf16.mxu0 0
      %328 = vmatpush1.bf16.msra.mxu0 %v306
      %329 = vmatprep.subr.bf16.mxu0 0
      %330 = vmatpush1.bf16.msra.mxu0 %v305
      %331 = vmatprep.subr.bf16.mxu0 0
      %332 = vmatpush1.bf16.msra.mxu0 %v304
      %333 = vmatprep.subr.bf16.mxu0 0
      %334 = vmatpush1.bf16.msra.mxu0 %v303
      %335 = vmatprep.subr.bf16.mxu0 0
      %336 = vmatpush2.bf16.msra.mxu0 0
      %337 = vmatprep.subr.bf16.mxu0 0
      %338 = vmatpush2.bf16.msra.mxu0 0
      %339 = vmatprep.subr.bf16.mxu0 0
      %340 = vmatpush2.bf16.msra.mxu0 0
      %341 = vmatprep.subr.bf16.mxu0 0
      %342 = vmatpush2.bf16.msra.mxu0 0
      %343 = vmatprep.subr.bf16.mxu0 0
      %344 = vmatpush2.bf16.msra.mxu0 0
      %345 = vmatprep.subr.bf16.mxu0 0
      %346 = vmatpush2.bf16.msra.mxu0 0
      %347 = vmatprep.subr.bf16.mxu0 0
      %348 = vmatpush2.bf16.msra.mxu0 0
      %349 = vmatprep.subr.bf16.mxu0 0
      %350 = vmatpush2.bf16.msra.mxu0 0
      %351 = vmatprep.mubr.bf16.mxu0 0
      %352 = vmatmul.mubr.bf16.gmra.mxu0 %v263
      %v353 = vpop.f32.mrf.mxu0
      %v354 = vadd.f32 0.0, %v353
      %v355 = vpop.f32.mrf.mxu0
      %v356 = vpop.f32.mrf.mxu0
      %v357 = vadd.f32 0.0, %v356
      %v358 = vpop.f32.mrf.mxu0
      %359 = vmatprep.mubr.bf16.mxu0 0
      %360 = vmatmul.mubr.bf16.gmra.mxu0 %v264
      %v361 = vpop.f32.mrf.mxu0
      %v362 = vadd.f32 0.0, %v361
      %v363 = vpop.f32.mrf.mxu0
      %v364 = vpop.f32.mrf.mxu0
      %v365 = vadd.f32 0.0, %v364
      %v366 = vpop.f32.mrf.mxu0
      %367 = vmatprep.mubr.bf16.mxu0 0
      %368 = vmatmul.mubr.bf16.gmra.mxu0 %v265
      %v369 = vpop.f32.mrf.mxu0
      %v370 = vadd.f32 0.0, %v369
      %v371 = vpop.f32.mrf.mxu0
      %v372 = vpop.f32.mrf.mxu0
      %v373 = vadd.f32 0.0, %v372
      %v374 = vpop.f32.mrf.mxu0
      %375 = vmatprep.mubr.bf16.mxu0 0
      %376 = vmatmul.mubr.bf16.gmra.mxu0 %v266
      %v377 = vpop.f32.mrf.mxu0
      %v378 = vadd.f32 0.0, %v377
      %v379 = vpop.f32.mrf.mxu0
      %v380 = vpop.f32.mrf.mxu0
      %v381 = vadd.f32 0.0, %v380
      %v382 = vpop.f32.mrf.mxu0
      %383 = vdwg.mxu0
      %v384 = vadd.f32 %v231, %v354
      %v385 = vadd.f32 %v232, %v357
      %v386 = vadd.f32 %v233, %v362
      %v387 = vadd.f32 %v234, %v365
      %v388 = vadd.f32 %v235, %v370
      %v389 = vadd.f32 %v236, %v373
      %v390 = vadd.f32 %v237, %v378
      %v391 = vadd.f32 %v238, %v381
      %392 = vst [vmem:[#allocation2] sm:$0xff] %v384
      %393 = vst [vmem:[#allocation2 + $0x8] sm:$0xff] %v385
      %394 = vst [vmem:[#allocation2 + $0x10] sm:$0xff] %v386
      %395 = vst [vmem:[#allocation2 + $0x18] sm:$0xff] %v387
      %396 = vst [vmem:[#allocation2 + $0x20] sm:$0xff] %v388
      %397 = vst [vmem:[#allocation2 + $0x28] sm:$0xff] %v389
      %398 = vst [vmem:[#allocation2 + $0x30] sm:$0xff] %v390
      %399 = vst [vmem:[#allocation2 + $0x38] sm:$0xff] %v391
      // Predicated region
      $region37: #{gcn_fs_forward.5} parent=31 // pred_check
        %p400 = pneg %p198
      $region38: #{gcn_fs_forward.5} parent=31 // pred_check_branch
        %402 = sbr.rel (%p400) target = $region40
      $region39: #{gcn_fs_forward.5} parent=31 // pred_region
        %v403 = vld [vmem:[#allocation2] sm:$0xff]
        %v404 = vld [vmem:[#allocation2 + $0x8] sm:$0xff]
        %v405 = vld [vmem:[#allocation2 + $0x10] sm:$0xff]
        %v406 = vld [vmem:[#allocation2 + $0x18] sm:$0xff]
        %v407 = vld [vmem:[#allocation2 + $0x20] sm:$0xff]
        %v408 = vld [vmem:[#allocation2 + $0x28] sm:$0xff]
        %v409 = vld [vmem:[#allocation2 + $0x30] sm:$0xff]
        %v410 = vld [vmem:[#allocation2 + $0x38] sm:$0xff]
        %v411 = vld [vmem:[%s2] sm:$0x1]
        %v413 = vlaneseq
        %v414 = vshrl.u32 %v413, 7
        %v415 = vsub.s32 0, %v414
        %v416 = vrot.slane %v411, %v415
        %v418 = vadd.f32 %v403, %v416
        %v419 = vadd.f32 %v404, %v416
        %v420 = vadd.f32 %v405, %v416
        %v421 = vadd.f32 %v406, %v416
        %v422 = vadd.f32 %v407, %v416
        %v423 = vadd.f32 %v408, %v416
        %v424 = vadd.f32 %v409, %v416
        %v425 = vadd.f32 %v410, %v416
        %v426 = vlaneseq
        %v427 = vand.u32 %v426, 127
        %vm428 = vcmp.lt.s32.totalorder %v427, 8
        %v429 = vsel %vm428, %v418, -1e+30
        %v430 = vsel %vm428, %v419, -1e+30
        %v431 = vsel %vm428, %v420, -1e+30
        %v432 = vsel %vm428, %v421, -1e+30
        %v433 = vsel %vm428, %v422, -1e+30
        %v434 = vsel %vm428, %v423, -1e+30
        %v435 = vsel %vm428, %v424, -1e+30
        %v436 = vsel %vm428, %v425, -1e+30
        %437 = vmax.xlane.f32.xlu0 %v429
        %v438 = vpop.xlane.xlu0 %437
        %439 = vmax.xlane.f32.xlu0 %v430
        %v440 = vpop.xlane.xlu0 %439
        %441 = vmax.xlane.f32.xlu0 %v431
        %v442 = vpop.xlane.xlu0 %441
        %443 = vmax.xlane.f32.xlu0 %v432
        %v444 = vpop.xlane.xlu0 %443
        %445 = vmax.xlane.f32.xlu0 %v433
        %v446 = vpop.xlane.xlu0 %445
        %447 = vmax.xlane.f32.xlu0 %v434
        %v448 = vpop.xlane.xlu0 %447
        %449 = vmax.xlane.f32.xlu0 %v435
        %v450 = vpop.xlane.xlu0 %449
        %451 = vmax.xlane.f32.xlu0 %v436
        %v452 = vpop.xlane.xlu0 %451
        %v453 = vsub.f32 %v429, %v438
        %v454 = vsub.f32 %v430, %v440
        %v455 = vsub.f32 %v431, %v442
        %v456 = vsub.f32 %v432, %v444
        %v457 = vsub.f32 %v433, %v446
        %v458 = vsub.f32 %v434, %v448
        %v459 = vsub.f32 %v435, %v450
        %v460 = vsub.f32 %v436, %v452
        %v461 = vmul.f32 %v453, 1.442695
        %v462 = vpow.pop %v461
        %v463 = vmul.f32 %v454, 1.442695
        %v464 = vpow.pop %v463
        %v465 = vmul.f32 %v455, 1.442695
        %v466 = vpow.pop %v465
        %v467 = vmul.f32 %v456, 1.442695
        %v468 = vpow.pop %v467
        %v469 = vmul.f32 %v457, 1.442695
        %v470 = vpow.pop %v469
        %v471 = vmul.f32 %v458, 1.442695
        %v472 = vpow.pop %v471
        %v473 = vmul.f32 %v459, 1.442695
        %v474 = vpow.pop %v473
        %v475 = vmul.f32 %v460, 1.442695
        %v476 = vpow.pop %v475
        %477 = vadd.xlane.f32.xlu0 %v462
        %v478 = vpop.xlane.xlu0 %477
        %479 = vadd.xlane.f32.xlu0 %v464
        %v480 = vpop.xlane.xlu0 %479
        %481 = vadd.xlane.f32.xlu0 %v466
        %v482 = vpop.xlane.xlu0 %481
        %483 = vadd.xlane.f32.xlu0 %v468
        %v484 = vpop.xlane.xlu0 %483
        %485 = vadd.xlane.f32.xlu0 %v470
        %v486 = vpop.xlane.xlu0 %485
        %487 = vadd.xlane.f32.xlu0 %v472
        %v488 = vpop.xlane.xlu0 %487
        %489 = vadd.xlane.f32.xlu0 %v474
        %v490 = vpop.xlane.xlu0 %489
        %491 = vadd.xlane.f32.xlu0 %v476
        %v492 = vpop.xlane.xlu0 %491
        %v493 = vlog2.pop %v478
        %v494 = vmul.f32 %v493, 0.6931472
        %v495 = vlog2.pop %v480
        %v496 = vmul.f32 %v495, 0.6931472
        %v497 = vlog2.pop %v482
        %v498 = vmul.f32 %v497, 0.6931472
        %v499 = vlog2.pop %v484
        %v500 = vmul.f32 %v499, 0.6931472
        %v501 = vlog2.pop %v486
        %v502 = vmul.f32 %v501, 0.6931472
        %v503 = vlog2.pop %v488
        %v504 = vmul.f32 %v503, 0.6931472
        %v505 = vlog2.pop %v490
        %v506 = vmul.f32 %v505, 0.6931472
        %v507 = vlog2.pop %v492
        %v508 = vmul.f32 %v507, 0.6931472
        %v509 = vsub.f32 %v453, %v494
        %v510 = vsub.f32 %v454, %v496
        %v511 = vsub.f32 %v455, %v498
        %v512 = vsub.f32 %v456, %v500
        %v513 = vsub.f32 %v457, %v502
        %v514 = vsub.f32 %v458, %v504
        %v515 = vsub.f32 %v459, %v506
        %v516 = vsub.f32 %v460, %v508
        %517 = vst [vmem:[%s195] sm:$0xff] %v509
        %518 = vst [vmem:[%s195 + $0x8] sm:$0xff] %v510
        %519 = vst [vmem:[%s195 + $0x10] sm:$0xff] %v511
        %520 = vst [vmem:[%s195 + $0x18] sm:$0xff] %v512
        %521 = vst [vmem:[%s195 + $0x20] sm:$0xff] %v513
        %522 = vst [vmem:[%s195 + $0x28] sm:$0xff] %v514
        %523 = vst [vmem:[%s195 + $0x30] sm:$0xff] %v515
        %524 = vst [vmem:[%s195 + $0x38] sm:$0xff] %v516
      $region40: #{gcn_fs_forward.5} parent=31 // pred_fallthru
        _
      %s525 = smul.u32 8, %s18
      %p526 = scmp.lt.s32.totalorder %s525, 15
      %s527 = scalar_select %p526, %s525, 15
      %s528 = smul.addr %s527, 8
      %s529 = scalar_lea.vmem %s3, %s528
      // Predicated region
      $region41: #{gcn_fs_forward.5} parent=31 // pred_check
        %p530 = pneg %p114
      $region42: #{gcn_fs_forward.5} parent=31 // pred_check_branch
        %532 = sbr.rel (%p530) target = $region44
      $region43: #{gcn_fs_forward.5} parent=31 // pred_region
        %s533 = smul.u32 8, %s18
      $region44: #{gcn_fs_forward.5} parent=31 // pred_fallthru
        _
    $region32: #{gcn_fs_forward.5} parent=5 // pred_fallthru
      _
    %p534 = scmp.le.s32.totalorder 2, %s9
    // Predicated region
    $region45: #{gcn_fs_forward.5} parent=5 // pred_check
      %p535 = pneg %p534
    $region46: #{gcn_fs_forward.5} parent=5 // pred_check_branch
      %537 = sbr.rel (%p535) target = $region48
    $region47: #{gcn_fs_forward.5} parent=5 // pred_region
      %s538 = ssub.s32 %s9, 2
      // Predicated region
      $region49: #{gcn_fs_forward.5} parent=47 // pred_check
        %p539 = pneg %p120
      $region50: #{gcn_fs_forward.5} parent=47 // pred_check_branch
        %541 = sbr.rel (%p539) target = $region52
      $region51: #{gcn_fs_forward.5} parent=47 // pred_region
        %s542 = smul.u32 8, %s20
        %p543 = scmp.lt.s32.totalorder %s542, 15
        %s544 = scalar_select %p543, %s542, 15
        %s545 = smul.addr %s544, 8
        %s546 = scalar_lea.vmem %s3, %s545
      $region52: #{gcn_fs_forward.5} parent=47 // pred_fallthru
        _
    $region48: #{gcn_fs_forward.5} parent=5 // pred_fallthru
      _
  $region6: #{gcn_fs_forward.5} parent=0 // loop_footer
    %s13 = sadd.s32 1, %s9
  $region7: #{gcn_fs_forward.5} parent=0 // loop_footer_branch
    %8 = sbr.rel target = $region3
  $region8: #{gcn_fs_forward.5} parent=0 // loop_exit
    _

// kernel: gcn_fs_forward.3
$region0: #{gcn_fs_forward.3}
  #allocation0 [shape = 'u32[]', space=smem, size = 0x4, offset = 0x4, fixed_abs, tag = 'smem constant byte address 0x4 - core index']
  #allocation1 [shape = 'u32[144,128]{1,0:T(1,128)}', space=vmem, size = 0x12000, scoped, tag = 'internal scratch']
  %s0 = inlined_call_operand.vmem [shape: bf16[128,128], index: 0, kind: input, shape index: {}]
  %s1 = inlined_call_operand.vmem [shape: bf16[128,128], index: 1, kind: input, shape index: {}]
  %s2 = inlined_call_operand.vmem [shape: bf16[128,128], index: 2, kind: input, shape index: {}]
  %s3 = inlined_call_operand.vmem [shape: bf16[128,128], index: 3, kind: input, shape index: {}]
  %s4 = inlined_call_operand.vmem [shape: bf16[128,128], index: 4, kind: output, shape index: {}]
  %s5 = sld [smem:[#allocation0]]
  $region49: #{gcn_fs_forward.3} parent=0
    _
  %s7 = ssub.s32 1, %s5
  %s8 = scalar_select 0, %s7, %s5
  loop: start=0, step=1, limit=4
  $region2: #{gcn_fs_forward.3} parent=0 // loop_pre_header
    _
  $region3: #{gcn_fs_forward.3} parent=0 // loop_header
    %s10 = sphi 0, %s14
    %p11 = scmp.ge.s32.totalorder %s10, 4
    %s20 = sphi 0, %s22
    %s23 = sphi 0, %s20
    %s24 = sphi 0, %s23
    %s40 = sphi 0, %s24
    %s44 = sphi 0, %s44
    %s46 = sphi 0, %s44
    %s47 = sphi 0, %s46
    %s61 = sphi 0, %s47
    %s65 = sphi 0, %s65
    %s67 = sphi 0, %s65
    %s68 = sphi 0, %s67
    %s82 = sphi 0, %s68
    %s86 = sphi 0, %s86
    %s88 = sphi 0, %s86
    %s89 = sphi 0, %s88
    %s103 = sphi 0, %s89
    %s109 = sphi 0, %s111
    %s112 = sphi 0, %s109
    %s113 = sphi 0, %s112
    %s129 = sphi 0, %s113
  $region4: #{gcn_fs_forward.3} parent=0 // loop_header_branch
    %13 = sbr.rel (%p11) target = $region8
  $region5: #{gcn_fs_forward.3} parent=0 // loop_body
    %s15 = ssub.s32 %s10, 1
    %s16 = ssub.s32 %s10, 2
    %s17 = sadd.s32 %s10, 1
    %s18 = ssub.s32 %s10, %s17
    %p19 = scmp.eq.s32.totalorder %s18, 0
    %s21 = sadd.s32 %s20, 1
    %s22 = scalar_select %p19, %s20, %s21
    %p25 = pneg %p19
    %p26 = scmp.eq.s32.totalorder %s10, 1
    %p27 = por %p25, %p26
    %p28 = scmp.ne.s32.totalorder %s20, %s23
    %p29 = scmp.eq.s32.totalorder %s10, 0
    %p30 = por %p28, %p29
    %p31 = scmp.ne.s32.totalorder %s20, %s23
    %p32 = scmp.eq.s32.totalorder %s15, 1
    %p33 = por %p31, %p32
    %p34 = scmp.ne.s32.totalorder %s23, %s24
    %p35 = scmp.eq.s32.totalorder %s15, 0
    %p36 = por %p34, %p35
    %p37 = scmp.ne.s32.totalorder %s23, %s24
    %p38 = scmp.eq.s32.totalorder %s16, 1
    %p39 = por %p37, %p38
    %p41 = scmp.ne.s32.totalorder %s24, %s40
    %p42 = scmp.eq.s32.totalorder %s16, 0
    %p43 = por %p41, %p42
    %s45 = sadd.s32 %s44, 1
    %p48 = scmp.eq.s32.totalorder %s10, 1
    %p49 = scmp.ne.s32.totalorder %s44, %s46
    %p50 = scmp.eq.s32.totalorder %s10, 0
    %p51 = por %p49, %p50
    %p52 = scmp.ne.s32.totalorder %s44, %s46
    %p53 = scmp.eq.s32.totalorder %s15, 1
    %p54 = por %p52, %p53
    %p55 = scmp.ne.s32.totalorder %s46, %s47
    %p56 = scmp.eq.s32.totalorder %s15, 0
    %p57 = por %p55, %p56
    %p58 = scmp.ne.s32.totalorder %s46, %s47
    %p59 = scmp.eq.s32.totalorder %s16, 1
    %p60 = por %p58, %p59
    %p62 = scmp.ne.s32.totalorder %s47, %s61
    %p63 = scmp.eq.s32.totalorder %s16, 0
    %p64 = por %p62, %p63
    %s66 = sadd.s32 %s65, 1
    %p69 = scmp.eq.s32.totalorder %s10, 1
    %p70 = scmp.ne.s32.totalorder %s65, %s67
    %p71 = scmp.eq.s32.totalorder %s10, 0
    %p72 = por %p70, %p71
    %p73 = scmp.ne.s32.totalorder %s65, %s67
    %p74 = scmp.eq.s32.totalorder %s15, 1
    %p75 = por %p73, %p74
    %p76 = scmp.ne.s32.totalorder %s67, %s68
    %p77 = scmp.eq.s32.totalorder %s15, 0
    %p78 = por %p76, %p77
    %p79 = scmp.ne.s32.totalorder %s67, %s68
    %p80 = scmp.eq.s32.totalorder %s16, 1
    %p81 = por %p79, %p80
    %p83 = scmp.ne.s32.totalorder %s68, %s82
    %p84 = scmp.eq.s32.totalorder %s16, 0
    %p85 = por %p83, %p84
    %s87 = sadd.s32 %s86, 1
    %p90 = scmp.eq.s32.totalorder %s10, 1
    %p91 = scmp.ne.s32.totalorder %s86, %s88
    %p92 = scmp.eq.s32.totalorder %s10, 0
    %p93 = por %p91, %p92
    %p94 = scmp.ne.s32.totalorder %s86, %s88
    %p95 = scmp.eq.s32.totalorder %s15, 1
    %p96 = por %p94, %p95
    %p97 = scmp.ne.s32.totalorder %s88, %s89
    %p98 = scmp.eq.s32.totalorder %s15, 0
    %p99 = por %p97, %p98
    %p100 = scmp.ne.s32.totalorder %s88, %s89
    %p101 = scmp.eq.s32.totalorder %s16, 1
    %p102 = por %p100, %p101
    %p104 = scmp.ne.s32.totalorder %s89, %s103
    %p105 = scmp.eq.s32.totalorder %s16, 0
    %p106 = por %p104, %p105
    %s107 = ssub.s32 %s10, %s17
    %p108 = scmp.eq.s32.totalorder %s107, 0
    %s110 = sadd.s32 %s109, 1
    %s111 = scalar_select %p108, %s109, %s110
    %p114 = pneg %p108
    %p115 = scmp.eq.s32.totalorder %s10, 1
    %p116 = por %p114, %p115
    %p117 = scmp.ne.s32.totalorder %s109, %s112
    %p118 = scmp.eq.s32.totalorder %s10, 0
    %p119 = por %p117, %p118
    %p120 = scmp.ne.s32.totalorder %s109, %s112
    %p121 = scmp.eq.s32.totalorder %s15, 1
    %p122 = por %p120, %p121
    %p123 = scmp.ne.s32.totalorder %s112, %s113
    %p124 = scmp.eq.s32.totalorder %s15, 0
    %p125 = por %p123, %p124
    %p126 = scmp.ne.s32.totalorder %s112, %s113
    %p127 = scmp.eq.s32.totalorder %s16, 1
    %p128 = por %p126, %p127
    %p130 = scmp.ne.s32.totalorder %s113, %s129
    %p131 = scmp.eq.s32.totalorder %s16, 0
    %p132 = por %p130, %p131
    %p133 = scmp.le.s32.totalorder 1, %s10
    %p134 = scmp.lt.s32.totalorder %s10, 3
    %p135 = pnand %p133, %p134
    %p136 = pneg %p135
    // Predicated region
    $region9: #{gcn_fs_forward.3} parent=5 // pred_check
      _
    $region10: #{gcn_fs_forward.3} parent=5 // pred_check_branch
      %138 = sbr.rel (%p135) target = $region12
    $region11: #{gcn_fs_forward.3} parent=5 // pred_region
      %s139 = ssub.s32 %s10, 1
      // Predicated region
      $region13: #{gcn_fs_forward.3} parent=11 // pred_check
        %p140 = pneg %p57
      $region14: #{gcn_fs_forward.3} parent=11 // pred_check_branch
        %142 = sbr.rel (%p140) target = $region16
      $region15: #{gcn_fs_forward.3} parent=11 // pred_region
        _
      $region16: #{gcn_fs_forward.3} parent=11 // pred_fallthru
        _
      // Predicated region
      $region17: #{gcn_fs_forward.3} parent=11 // pred_check
        %p143 = pneg %p78
      $region18: #{gcn_fs_forward.3} parent=11 // pred_check_branch
        %145 = sbr.rel (%p143) target = $region20
      $region19: #{gcn_fs_forward.3} parent=11 // pred_region
        _
      $region20: #{gcn_fs_forward.3} parent=11 // pred_fallthru
        _
      // Predicated region
      $region21: #{gcn_fs_forward.3} parent=11 // pred_check
        %p146 = pneg %p99
      $region22: #{gcn_fs_forward.3} parent=11 // pred_check_branch
        %148 = sbr.rel (%p146) target = $region24
      $region23: #{gcn_fs_forward.3} parent=11 // pred_region
        _
      $region24: #{gcn_fs_forward.3} parent=11 // pred_fallthru
        _
    $region12: #{gcn_fs_forward.3} parent=5 // pred_fallthru
      _
    %p149 = scmp.lt.s32.totalorder %s10, 2
    // Predicated region
    $region25: #{gcn_fs_forward.3} parent=5 // pred_check
      %p150 = pneg %p149
    $region26: #{gcn_fs_forward.3} parent=5 // pred_check_branch
      %152 = sbr.rel (%p150) target = $region28
    $region27: #{gcn_fs_forward.3} parent=5 // pred_region
      // Predicated region
      $region29: #{gcn_fs_forward.3} parent=27 // pred_check
        %p153 = pneg %p30
      $region30: #{gcn_fs_forward.3} parent=27 // pred_check_branch
        %155 = sbr.rel (%p153) target = $region32
      $region31: #{gcn_fs_forward.3} parent=27 // pred_region
        %s156 = smul.u32 8, %s10
        %p157 = scmp.lt.s32.totalorder %s156, 15
        %s158 = scalar_select %p157, %s156, 15
        %s159 = smul.addr %s158, 4
        %s160 = scalar_lea.vmem %s0, %s159
        %s161 = smul.u32 8, %s10
      $region32: #{gcn_fs_forward.3} parent=27 // pred_fallthru
        _
    $region28: #{gcn_fs_forward.3} parent=5 // pred_fallthru
      _
    %p162 = scmp.le.s32.totalorder 1, %s10
    %p163 = scmp.lt.s32.totalorder %s10, 3
    %p164 = pnand %p162, %p163
    %p165 = pneg %p164
    // Predicated region
    $region33: #{gcn_fs_forward.3} parent=5 // pred_check
      _
    $region34: #{gcn_fs_forward.3} parent=5 // pred_check_branch
      %167 = sbr.rel (%p164) target = $region36
    $region35: #{gcn_fs_forward.3} parent=5 // pred_region
      %s168 = ssub.s32 %s10, 1
      %s169 = smul.u32 8, %s15
      %p170 = scmp.lt.s32.totalorder %s169, 15
      %s171 = scalar_select %p170, %s169, 15
      %s172 = smul.addr %s171, 4
      %s173 = scalar_lea.vmem %s0, %s172
      %p174 = pneg %p36
      %p175 = pneg %p33
      %p176 = pneg %p57
      %p177 = pneg %p54
      %p178 = pneg %p78
      %p179 = pneg %p75
      %p180 = pneg %p99
      %p181 = pneg %p96
      %p182 = pneg %p125
      %p183 = pneg %p122
      %s184 = smul.u32 8, %s15
      %p185 = scmp.lt.s32.totalorder %s184, 15
      %s186 = scalar_select %p185, %s184, 15
      %s187 = smul.addr %s186, 4
      %s188 = scalar_lea.vmem %s4, %s187
      %s189 = smul.u32 8, %s15
      %p190 = scmp.lt.s32.totalorder %s189, 15
      %s191 = scalar_select %p190, %s189, 15
      %s192 = smul.addr %s191, 4
      %s193 = scalar_lea.vmem %s0, %s192
      %s194 = smul.u32 8, %s15
      %s195 = smul.u32 8, %s15
      %p196 = scmp.lt.s32.totalorder %s195, 15
      %s197 = scalar_select %p196, %s195, 15
      %s198 = smul.addr %s197, 4
      %s199 = scalar_lea.vmem %s4, %s198
      %s200 = smul.u32 8, %s15
      %v202 = vld [vmem:[%s193] sm:$0xf]
      %v203 = vld [vmem:[%s193 + $0x4] sm:$0xf]
      %v204 = vld [vmem:[%s193 + $0x8] sm:$0xf]
      %v205 = vld [vmem:[%s193 + $0xc] sm:$0xf]
      %v206 = vld [vmem:[%s193 + $0x10] sm:$0xf]
      %v207 = vld [vmem:[%s193 + $0x14] sm:$0xf]
      %v208 = vld [vmem:[%s193 + $0x18] sm:$0xf]
      %v209 = vld [vmem:[%s193 + $0x1c] sm:$0xf]
      %v210 = vld [vmem:[%s1] sm:$0xf]
      %v211 = vld [vmem:[%s1 + $0x4] sm:$0xf]
      %v212 = vld [vmem:[%s1 + $0x8] sm:$0xf]
      %v213 = vld [vmem:[%s1 + $0xc] sm:$0xf]
      %v214 = vld [vmem:[%s1 + $0x10] sm:$0xf]
      %v215 = vld [vmem:[%s1 + $0x14] sm:$0xf]
      %v216 = vld [vmem:[%s1 + $0x18] sm:$0xf]
      %v217 = vld [vmem:[%s1 + $0x1c] sm:$0xf]
      %v218 = vld [vmem:[%s1 + $0x20] sm:$0xf]
      %v219 = vld [vmem:[%s1 + $0x24] sm:$0xf]
      %v220 = vld [vmem:[%s1 + $0x28] sm:$0xf]
      %v221 = vld [vmem:[%s1 + $0x2c] sm:$0xf]
      %v222 = vld [vmem:[%s1 + $0x30] sm:$0xf]
      %v223 = vld [vmem:[%s1 + $0x34] sm:$0xf]
      %v224 = vld [vmem:[%s1 + $0x38] sm:$0xf]
      %v225 = vld [vmem:[%s1 + $0x3c] sm:$0xf]
      %v234 = vunpack.c.l.b16 %v202
      %v235 = vunpack.c.l.b16 %v203
      %v236 = vunpack.c.l.b16 %v204
      %v237 = vunpack.c.l.b16 %v205
      %v238 = vunpack.c.l.b16 %v206
      %v239 = vunpack.c.l.b16 %v207
      %v240 = vunpack.c.l.b16 %v208
      %v241 = vunpack.c.l.b16 %v209
      %v242 = vpack.c.b16 %v235, %v234
      %v243 = vpack.c.b16 %v237, %v236
      %v244 = vpack.c.b16 %v239, %v238
      %v245 = vpack.c.b16 %v241, %v240
      %v266 = vunpack.c.l.b16 %v210
      %v267 = vunpack.c.l.b16 %v211
      %v268 = vunpack.c.l.b16 %v212
      %v269 = vunpack.c.l.b16 %v213
      %v270 = vunpack.c.l.b16 %v214
      %v271 = vunpack.c.l.b16 %v215
      %v272 = vunpack.c.l.b16 %v216
      %v273 = vunpack.c.l.b16 %v217
      %v274 = vunpack.c.l.b16 %v218
      %v275 = vunpack.c.l.b16 %v219
      %v276 = vunpack.c.l.b16 %v220
      %v277 = vunpack.c.l.b16 %v221
      %v278 = vunpack.c.l.b16 %v222
      %v279 = vunpack.c.l.b16 %v223
      %v280 = vunpack.c.l.b16 %v224
      %v281 = vunpack.c.l.b16 %v225
      %v282 = vpack.c.b16 %v267, %v266
      %v283 = vpack.c.b16 %v269, %v268
      %v284 = vpack.c.b16 %v271, %v270
      %v285 = vpack.c.b16 %v273, %v272
      %v286 = vpack.c.b16 %v275, %v274
      %v287 = vpack.c.b16 %v277, %v276
      %v288 = vpack.c.b16 %v279, %v278
      %v289 = vpack.c.b16 %v281, %v280
      %298 = vmatprep.subr.bf16.mxu0 0
      %299 = vmatpush1.bf16.msra.mxu0 %v289
      %300 = vmatprep.subr.bf16.mxu0 0
      %301 = vmatpush1.bf16.msra.mxu0 %v288
      %302 = vmatprep.subr.bf16.mxu0 0
      %303 = vmatpush1.bf16.msra.mxu0 %v287
      %304 = vmatprep.subr.bf16.mxu0 0
      %305 = vmatpush1.bf16.msra.mxu0 %v286
      %306 = vmatprep.subr.bf16.mxu0 0
      %307 = vmatpush1.bf16.msra.mxu0 %v285
      %308 = vmatprep.subr.bf16.mxu0 0
      %309 = vmatpush1.bf16.msra.mxu0 %v284
      %310 = vmatprep.subr.bf16.mxu0 0
      %311 = vmatpush1.bf16.msra.mxu0 %v283
      %312 = vmatprep.subr.bf16.mxu0 0
      %313 = vmatpush1.bf16.msra.mxu0 %v282
      %314 = vmatprep.subr.bf16.mxu0 0
      %315 = vmatpush2.bf16.msra.mxu0 0
      %316 = vmatprep.subr.bf16.mxu0 0
      %317 = vmatpush2.bf16.msra.mxu0 0
      %318 = vmatprep.subr.bf16.mxu0 0
      %319 = vmatpush2.bf16.msra.mxu0 0
      %320 = vmatprep.subr.bf16.mxu0 0
      %321 = vmatpush2.bf16.msra.mxu0 0
      %322 = vmatprep.subr.bf16.mxu0 0
      %323 = vmatpush2.bf16.msra.mxu0 0
      %324 = vmatprep.subr.bf16.mxu0 0
      %325 = vmatpush2.bf16.msra.mxu0 0
      %326 = vmatprep.subr.bf16.mxu0 0
      %327 = vmatpush2.bf16.msra.mxu0 0
      %328 = vmatprep.subr.bf16.mxu0 0
      %329 = vmatpush2.bf16.msra.mxu0 0
      %330 = vmatprep.mubr.bf16.mxu0 0
      %331 = vmatmul.mubr.bf16.gmra.mxu0 %v242
      %v332 = vpop.f32.mrf.mxu0
      %v333 = vadd.f32 0.0, %v332
      %v334 = vpop.f32.mrf.mxu0
      %v335 = vpop.f32.mrf.mxu0
      %v336 = vadd.f32 0.0, %v335
      %v337 = vpop.f32.mrf.mxu0
      %338 = vmatprep.mubr.bf16.mxu0 0
      %339 = vmatmul.mubr.bf16.gmra.mxu0 %v243
      %v340 = vpop.f32.mrf.mxu0
      %v341 = vadd.f32 0.0, %v340
      %v342 = vpop.f32.mrf.mxu0
      %v343 = vpop.f32.mrf.mxu0
      %v344 = vadd.f32 0.0, %v343
      %v345 = vpop.f32.mrf.mxu0
      %346 = vmatprep.mubr.bf16.mxu0 0
      %347 = vmatmul.mubr.bf16.gmra.mxu0 %v244
      %v348 = vpop.f32.mrf.mxu0
      %v349 = vadd.f32 0.0, %v348
      %v350 = vpop.f32.mrf.mxu0
      %v351 = vpop.f32.mrf.mxu0
      %v352 = vadd.f32 0.0, %v351
      %v353 = vpop.f32.mrf.mxu0
      %354 = vmatprep.mubr.bf16.mxu0 0
      %355 = vmatmul.mubr.bf16.gmra.mxu0 %v245
      %v356 = vpop.f32.mrf.mxu0
      %v357 = vadd.f32 0.0, %v356
      %v358 = vpop.f32.mrf.mxu0
      %v359 = vpop.f32.mrf.mxu0
      %v360 = vadd.f32 0.0, %v359
      %v361 = vpop.f32.mrf.mxu0
      %362 = vdwg.mxu0
      %v363 = vmax.f32 %v333, 0.0
      %v364 = vmax.f32 %v336, 0.0
      %v365 = vmax.f32 %v341, 0.0
      %v366 = vmax.f32 %v344, 0.0
      %v367 = vmax.f32 %v349, 0.0
      %v368 = vmax.f32 %v352, 0.0
      %v369 = vmax.f32 %v357, 0.0
      %v370 = vmax.f32 %v360, 0.0
      %v371 = vpack.c.bf16 %v364, %v363
      %v372 = vpack.c.bf16 %v366, %v365
      %v373 = vpack.c.bf16 %v368, %v367
      %v374 = vpack.c.bf16 %v370, %v369
      %v375 = vld [vmem:[%s2] sm:$0xf]
      %v376 = vld [vmem:[%s2 + $0x4] sm:$0xf]
      %v377 = vld [vmem:[%s2 + $0x8] sm:$0xf]
      %v378 = vld [vmem:[%s2 + $0xc] sm:$0xf]
      %v379 = vld [vmem:[%s2 + $0x10] sm:$0xf]
      %v380 = vld [vmem:[%s2 + $0x14] sm:$0xf]
      %v381 = vld [vmem:[%s2 + $0x18] sm:$0xf]
      %v382 = vld [vmem:[%s2 + $0x1c] sm:$0xf]
      %v383 = vld [vmem:[%s2 + $0x20] sm:$0xf]
      %v384 = vld [vmem:[%s2 + $0x24] sm:$0xf]
      %v385 = vld [vmem:[%s2 + $0x28] sm:$0xf]
      %v386 = vld [vmem:[%s2 + $0x2c] sm:$0xf]
      %v387 = vld [vmem:[%s2 + $0x30] sm:$0xf]
      %v388 = vld [vmem:[%s2 + $0x34] sm:$0xf]
      %v389 = vld [vmem:[%s2 + $0x38] sm:$0xf]
      %v390 = vld [vmem:[%s2 + $0x3c] sm:$0xf]
      %v407 = vunpack.c.l.b16 %v375
      %v408 = vunpack.c.l.b16 %v376
      %v409 = vunpack.c.l.b16 %v377
      %v410 = vunpack.c.l.b16 %v378
      %v411 = vunpack.c.l.b16 %v379
      %v412 = vunpack.c.l.b16 %v380
      %v413 = vunpack.c.l.b16 %v381
      %v414 = vunpack.c.l.b16 %v382
      %v415 = vunpack.c.l.b16 %v383
      %v416 = vunpack.c.l.b16 %v384
      %v417 = vunpack.c.l.b16 %v385
      %v418 = vunpack.c.l.b16 %v386
      %v419 = vunpack.c.l.b16 %v387
      %v420 = vunpack.c.l.b16 %v388
      %v421 = vunpack.c.l.b16 %v389
      %v422 = vunpack.c.l.b16 %v390
      %v423 = vpack.c.b16 %v408, %v407
      %v424 = vpack.c.b16 %v410, %v409
      %v425 = vpack.c.b16 %v412, %v411
      %v426 = vpack.c.b16 %v414, %v413
      %v427 = vpack.c.b16 %v416, %v415
      %v428 = vpack.c.b16 %v418, %v417
      %v429 = vpack.c.b16 %v420, %v419
      %v430 = vpack.c.b16 %v422, %v421
      %439 = vmatprep.subr.bf16.mxu0 0
      %440 = vmatpush1.bf16.msra.mxu0 %v430
      %441 = vmatprep.subr.bf16.mxu0 0
      %442 = vmatpush1.bf16.msra.mxu0 %v429
      %443 = vmatprep.subr.bf16.mxu0 0
      %444 = vmatpush1.bf16.msra.mxu0 %v428
      %445 = vmatprep.subr.bf16.mxu0 0
      %446 = vmatpush1.bf16.msra.mxu0 %v427
      %447 = vmatprep.subr.bf16.mxu0 0
      %448 = vmatpush1.bf16.msra.mxu0 %v426
      %449 = vmatprep.subr.bf16.mxu0 0
      %450 = vmatpush1.bf16.msra.mxu0 %v425
      %451 = vmatprep.subr.bf16.mxu0 0
      %452 = vmatpush1.bf16.msra.mxu0 %v424
      %453 = vmatprep.subr.bf16.mxu0 0
      %454 = vmatpush1.bf16.msra.mxu0 %v423
      %455 = vmatprep.subr.bf16.mxu0 0
      %456 = vmatpush2.bf16.msra.mxu0 0
      %457 = vmatprep.subr.bf16.mxu0 0
      %458 = vmatpush2.bf16.msra.mxu0 0
      %459 = vmatprep.subr.bf16.mxu0 0
      %460 = vmatpush2.bf16.msra.mxu0 0
      %461 = vmatprep.subr.bf16.mxu0 0
      %462 = vmatpush2.bf16.msra.mxu0 0
      %463 = vmatprep.subr.bf16.mxu0 0
      %464 = vmatpush2.bf16.msra.mxu0 0
      %465 = vmatprep.subr.bf16.mxu0 0
      %466 = vmatpush2.bf16.msra.mxu0 0
      %467 = vmatprep.subr.bf16.mxu0 0
      %468 = vmatpush2.bf16.msra.mxu0 0
      %469 = vmatprep.subr.bf16.mxu0 0
      %470 = vmatpush2.bf16.msra.mxu0 0
      %471 = vmatprep.mubr.bf16.mxu0 0
      %472 = vmatmul.mubr.bf16.gmra.mxu0 %v371
      %v473 = vpop.f32.mrf.mxu0
      %v474 = vadd.f32 0.0, %v473
      %v475 = vpop.f32.mrf.mxu0
      %v476 = vpop.f32.mrf.mxu0
      %v477 = vadd.f32 0.0, %v476
      %v478 = vpop.f32.mrf.mxu0
      %479 = vmatprep.mubr.bf16.mxu0 0
      %480 = vmatmul.mubr.bf16.gmra.mxu0 %v372
      %v481 = vpop.f32.mrf.mxu0
      %v482 = vadd.f32 0.0, %v481
      %v483 = vpop.f32.mrf.mxu0
      %v484 = vpop.f32.mrf.mxu0
      %v485 = vadd.f32 0.0, %v484
      %v486 = vpop.f32.mrf.mxu0
      %487 = vmatprep.mubr.bf16.mxu0 0
      %488 = vmatmul.mubr.bf16.gmra.mxu0 %v373
      %v489 = vpop.f32.mrf.mxu0
      %v490 = vadd.f32 0.0, %v489
      %v491 = vpop.f32.mrf.mxu0
      %v492 = vpop.f32.mrf.mxu0
      %v493 = vadd.f32 0.0, %v492
      %v494 = vpop.f32.mrf.mxu0
      %495 = vmatprep.mubr.bf16.mxu0 0
      %496 = vmatmul.mubr.bf16.gmra.mxu0 %v374
      %v497 = vpop.f32.mrf.mxu0
      %v498 = vadd.f32 0.0, %v497
      %v499 = vpop.f32.mrf.mxu0
      %v500 = vpop.f32.mrf.mxu0
      %v501 = vadd.f32 0.0, %v500
      %v502 = vpop.f32.mrf.mxu0
      %503 = vdwg.mxu0
      %v504 = vpack.c.bf16 %v477, %v474
      %v505 = vpack.c.bf16 %v485, %v482
      %v506 = vpack.c.bf16 %v493, %v490
      %v507 = vpack.c.bf16 %v501, %v498
      %v508 = vld [vmem:[%s3] sm:$0xf]
      %v509 = vld [vmem:[%s3 + $0x4] sm:$0xf]
      %v510 = vld [vmem:[%s3 + $0x8] sm:$0xf]
      %v511 = vld [vmem:[%s3 + $0xc] sm:$0xf]
      %v512 = vld [vmem:[%s3 + $0x10] sm:$0xf]
      %v513 = vld [vmem:[%s3 + $0x14] sm:$0xf]
      %v514 = vld [vmem:[%s3 + $0x18] sm:$0xf]
      %v515 = vld [vmem:[%s3 + $0x1c] sm:$0xf]
      %v516 = vld [vmem:[%s3 + $0x20] sm:$0xf]
      %v517 = vld [vmem:[%s3 + $0x24] sm:$0xf]
      %v518 = vld [vmem:[%s3 + $0x28] sm:$0xf]
      %v519 = vld [vmem:[%s3 + $0x2c] sm:$0xf]
      %v520 = vld [vmem:[%s3 + $0x30] sm:$0xf]
      %v521 = vld [vmem:[%s3 + $0x34] sm:$0xf]
      %v522 = vld [vmem:[%s3 + $0x38] sm:$0xf]
      %v523 = vld [vmem:[%s3 + $0x3c] sm:$0xf]
      %v540 = vunpack.c.l.b16 %v508
      %v541 = vunpack.c.l.b16 %v509
      %v542 = vunpack.c.l.b16 %v510
      %v543 = vunpack.c.l.b16 %v511
      %v544 = vunpack.c.l.b16 %v512
      %v545 = vunpack.c.l.b16 %v513
      %v546 = vunpack.c.l.b16 %v514
      %v547 = vunpack.c.l.b16 %v515
      %v548 = vunpack.c.l.b16 %v516
      %v549 = vunpack.c.l.b16 %v517
      %v550 = vunpack.c.l.b16 %v518
      %v551 = vunpack.c.l.b16 %v519
      %v552 = vunpack.c.l.b16 %v520
      %v553 = vunpack.c.l.b16 %v521
      %v554 = vunpack.c.l.b16 %v522
      %v555 = vunpack.c.l.b16 %v523
      %v556 = vpack.c.b16 %v541, %v540
      %v557 = vpack.c.b16 %v543, %v542
      %v558 = vpack.c.b16 %v545, %v544
      %v559 = vpack.c.b16 %v547, %v546
      %v560 = vpack.c.b16 %v549, %v548
      %v561 = vpack.c.b16 %v551, %v550
      %v562 = vpack.c.b16 %v553, %v552
      %v563 = vpack.c.b16 %v555, %v554
      %572 = vmatprep.subr.bf16.mxu0 0
      %573 = vmatpush1.bf16.msra.mxu0 %v563
      %574 = vmatprep.subr.bf16.mxu0 0
      %575 = vmatpush1.bf16.msra.mxu0 %v562
      %576 = vmatprep.subr.bf16.mxu0 0
      %577 = vmatpush1.bf16.msra.mxu0 %v561
      %578 = vmatprep.subr.bf16.mxu0 0
      %579 = vmatpush1.bf16.msra.mxu0 %v560
      %580 = vmatprep.subr.bf16.mxu0 0
      %581 = vmatpush1.bf16.msra.mxu0 %v559
      %582 = vmatprep.subr.bf16.mxu0 0
      %583 = vmatpush1.bf16.msra.mxu0 %v558
      %584 = vmatprep.subr.bf16.mxu0 0
      %585 = vmatpush1.bf16.msra.mxu0 %v557
      %586 = vmatprep.subr.bf16.mxu0 0
      %587 = vmatpush1.bf16.msra.mxu0 %v556
      %588 = vmatprep.subr.bf16.mxu0 0
      %589 = vmatpush2.bf16.msra.mxu0 0
      %590 = vmatprep.subr.bf16.mxu0 0
      %591 = vmatpush2.bf16.msra.mxu0 0
      %592 = vmatprep.subr.bf16.mxu0 0
      %593 = vmatpush2.bf16.msra.mxu0 0
      %594 = vmatprep.subr.bf16.mxu0 0
      %595 = vmatpush2.bf16.msra.mxu0 0
      %596 = vmatprep.subr.bf16.mxu0 0
      %597 = vmatpush2.bf16.msra.mxu0 0
      %598 = vmatprep.subr.bf16.mxu0 0
      %599 = vmatpush2.bf16.msra.mxu0 0
      %600 = vmatprep.subr.bf16.mxu0 0
      %601 = vmatpush2.bf16.msra.mxu0 0
      %602 = vmatprep.subr.bf16.mxu0 0
      %603 = vmatpush2.bf16.msra.mxu0 0
      %604 = vmatprep.mubr.bf16.mxu0 0
      %605 = vmatmul.mubr.bf16.gmra.mxu0 %v504
      %v606 = vpop.f32.mrf.mxu0
      %v607 = vadd.f32 0.0, %v606
      %v608 = vpop.f32.mrf.mxu0
      %v609 = vpop.f32.mrf.mxu0
      %v610 = vadd.f32 0.0, %v609
      %v611 = vpop.f32.mrf.mxu0
      %612 = vmatprep.mubr.bf16.mxu0 0
      %613 = vmatmul.mubr.bf16.gmra.mxu0 %v505
      %v614 = vpop.f32.mrf.mxu0
      %v615 = vadd.f32 0.0, %v614
      %v616 = vpop.f32.mrf.mxu0
      %v617 = vpop.f32.mrf.mxu0
      %v618 = vadd.f32 0.0, %v617
      %v619 = vpop.f32.mrf.mxu0
      %620 = vmatprep.mubr.bf16.mxu0 0
      %621 = vmatmul.mubr.bf16.gmra.mxu0 %v506
      %v622 = vpop.f32.mrf.mxu0
      %v623 = vadd.f32 0.0, %v622
      %v624 = vpop.f32.mrf.mxu0
      %v625 = vpop.f32.mrf.mxu0
      %v626 = vadd.f32 0.0, %v625
      %v627 = vpop.f32.mrf.mxu0
      %628 = vmatprep.mubr.bf16.mxu0 0
      %629 = vmatmul.mubr.bf16.gmra.mxu0 %v507
      %v630 = vpop.f32.mrf.mxu0
      %v631 = vadd.f32 0.0, %v630
      %v632 = vpop.f32.mrf.mxu0
      %v633 = vpop.f32.mrf.mxu0
      %v634 = vadd.f32 0.0, %v633
      %v635 = vpop.f32.mrf.mxu0
      %636 = vdwg.mxu0
      %v637 = vpack.c.bf16 %v610, %v607
      %v638 = vpack.c.bf16 %v618, %v615
      %v639 = vpack.c.bf16 %v626, %v623
      %v640 = vpack.c.bf16 %v634, %v631
      %v645 = vunpack.c.l.b16 %v637
      %v646 = vunpack.c.h.b16 %v637
      %v647 = vunpack.c.l.b16 %v638
      %v648 = vunpack.c.h.b16 %v638
      %v649 = vunpack.c.l.b16 %v639
      %v650 = vunpack.c.h.b16 %v639
      %v651 = vunpack.c.l.b16 %v640
      %v652 = vunpack.c.h.b16 %v640
      %v653 = vpack.c.b16 %v645, %v645
      %v654 = vpack.c.b16 %v646, %v646
      %v655 = vpack.c.b16 %v647, %v647
      %v656 = vpack.c.b16 %v648, %v648
      %v657 = vpack.c.b16 %v649, %v649
      %v658 = vpack.c.b16 %v650, %v650
      %v659 = vpack.c.b16 %v651, %v651
      %v660 = vpack.c.b16 %v652, %v652
      %669 = vst [vmem:[%s199] sm:$0xf] %v653
      %670 = vst [vmem:[%s199 + $0x4] sm:$0xf] %v654
      %671 = vst [vmem:[%s199 + $0x8] sm:$0xf] %v655
      %672 = vst [vmem:[%s199 + $0xc] sm:$0xf] %v656
      %673 = vst [vmem:[%s199 + $0x10] sm:$0xf] %v657
      %674 = vst [vmem:[%s199 + $0x14] sm:$0xf] %v658
      %675 = vst [vmem:[%s199 + $0x18] sm:$0xf] %v659
      %676 = vst [vmem:[%s199 + $0x1c] sm:$0xf] %v660
      %s677 = smul.u32 8, %s15
      %p678 = scmp.lt.s32.totalorder %s677, 15
      %s679 = scalar_select %p678, %s677, 15
      %s680 = smul.addr %s679, 4
      %s681 = scalar_lea.vmem %s4, %s680
      // Predicated region
      $region37: #{gcn_fs_forward.3} parent=35 // pred_check
        %p682 = pneg %p122
      $region38: #{gcn_fs_forward.3} parent=35 // pred_check_branch
        %684 = sbr.rel (%p682) target = $region40
      $region39: #{gcn_fs_forward.3} parent=35 // pred_region
        %s685 = smul.u32 8, %s15
      $region40: #{gcn_fs_forward.3} parent=35 // pred_fallthru
        _
    $region36: #{gcn_fs_forward.3} parent=5 // pred_fallthru
      _
    %p686 = scmp.le.s32.totalorder 2, %s10
    // Predicated region
    $region41: #{gcn_fs_forward.3} parent=5 // pred_check
      %p687 = pneg %p686
    $region42: #{gcn_fs_forward.3} parent=5 // pred_check_branch
      %689 = sbr.rel (%p687) target = $region44
    $region43: #{gcn_fs_forward.3} parent=5 // pred_region
      %s690 = ssub.s32 %s10, 2
      // Predicated region
      $region45: #{gcn_fs_forward.3} parent=43 // pred_check
        %p691 = pneg %p128
      $region46: #{gcn_fs_forward.3} parent=43 // pred_check_branch
        %693 = sbr.rel (%p691) target = $region48
      $region47: #{gcn_fs_forward.3} parent=43 // pred_region
        %s694 = smul.u32 8, %s16
        %p695 = scmp.lt.s32.totalorder %s694, 15
        %s696 = scalar_select %p695, %s694, 15
        %s697 = smul.addr %s696, 4
        %s698 = scalar_lea.vmem %s4, %s697
      $region48: #{gcn_fs_forward.3} parent=43 // pred_fallthru
        _
    $region44: #{gcn_fs_forward.3} parent=5 // pred_fallthru
      _
  $region6: #{gcn_fs_forward.3} parent=0 // loop_footer
    %s14 = sadd.s32 1, %s10
  $region7: #{gcn_fs_forward.3} parent=0 // loop_footer_branch
    %9 = sbr.rel target = $region3
  $region8: #{gcn_fs_forward.3} parent=0 // loop_exit
    _

</llo_original>
